<compile_context>
chip_gen: v7x
topology: tpu7x:2x2x1
jax: 0.10.0
libtpu: 0.0.40
codegen_flags: <defaults>
</compile_context>

<pallas_src>
import jax
import jax.numpy as jnp
from jax import lax
from jax.experimental import pallas as pl
from jax.experimental.pallas import tpu as pltpu

LIDAR_DIM = 14
USE_POS = True
HIDDEN = 32            # small stand-in for hidden_size=128
NUM_HEADS = 4
NUM_LAYERS = 2
INTERMEDIATE = HIDDEN * 4
LN_EPS = 1e-12         # BertConfig default layer_norm_eps
INV_SQRT2 = 0.7071067811865476
OUT_DIM = 2
OUT_ROWS = 8           # head rows padded to one sublane group
DEFAULT_TILE_B = 4096  # batch columns (lanes) per grid step, multiple of 128


def _round_up(x, m):
    return ((x + m - 1) // m) * m


def _layernorm_T(h, g, b):
    """Single-pass LayerNorm over the hidden (sublane) axis of an (H, B) tile.

    var = max(E[h^2] - mu^2, 0) guards against cancellation going negative.
    rsqrt lowers to the EUP (separate bundle slot).
    """
    mu = jnp.mean(h, axis=0, keepdims=True)
    mu2 = jnp.mean(h * h, axis=0, keepdims=True)
    var = jnp.maximum(mu2 - mu * mu, 0.0)
    return (h - mu) * lax.rsqrt(var + LN_EPS) * g + b


def lidar_bert_kernel(xT_ref, w_in_ref, b_in_ref, ln_e_g_ref, ln_e_b_ref,
                      w_attn_ref, b_attn_ref, ln1_g_ref, ln1_b_ref,
                      wi_ref, bi_ref, w2_ref, b2_ref, ln2_g_ref, ln2_b_ref,
                      w_out_ref, b_out_ref, out_ref):
    # Activations live transposed: (hidden, TILE_B) -> batch on lanes.
    # input_fc (bias pre-summed with position-0 + token-type-0 embedding rows),
    # then the BERT embedding LayerNorm.
    h = (jnp.dot(w_in_ref[...], xT_ref[...], preferred_element_type=jnp.float32)
         + b_in_ref[...])
    h = _layernorm_T(h, ln_e_g_ref[...], ln_e_b_ref[...])

    for l in range(NUM_LAYERS):
        # seq_len == 1: softmax over one key is exactly 1.0, so the attention
        # context equals the V projection and Q/K cancel; V and O are folded
        # offline into one (H, H) matmul (exact).
        attn = (jnp.dot(w_attn_ref[l], h, preferred_element_type=jnp.float32)
                + b_attn_ref[l])
        h1 = _layernorm_T(attn + h, ln1_g_ref[l], ln1_b_ref[l])
        inter = (jnp.dot(wi_ref[l], h1, preferred_element_type=jnp.float32)
                 + bi_ref[l])
        # HF BertIntermediate default act = exact (erf-based) GELU.
        inter = 0.5 * inter * (1.0 + lax.erf(inter * INV_SQRT2))
        ffo = (jnp.dot(w2_ref[l], inter, preferred_element_type=jnp.float32)
               + b2_ref[l])
        h = _layernorm_T(ffo + h1, ln2_g_ref[l], ln2_b_ref[l])

    # output_fc on the only token; rows zero-padded to OUT_ROWS sublanes so
    # the store is a single lane-dense (8, TILE_B) block.
    out_ref[...] = (jnp.dot(w_out_ref[...], h, preferred_element_type=jnp.float32)
                    + b_out_ref[...])


def prepare_kernel_params(p):
    """Offline folding + transposition into the exact set the kernel consumes.

    All tensors are stored transposed ((out, in) weights, (H, 1) biases) so the
    kernel computes W^T @ X with batch on the lane axis.
    """
    kp = {}
    kp["w_inT"] = p["w_in"].T                                    # (H, d_in)
    # input_fc bias + position_embeddings[0] + token_type_embeddings[0].
    kp["b_inT"] = (p["b_in"] + p["emb_add"]).T                   # (H, 1)
    kp["ln_e_gT"] = p["ln_e_g"].T                                # (H, 1)
    kp["ln_e_bT"] = p["ln_e_b"].T
    # Fold V and O projections (exact for seq_len == 1), then transpose.
    w_attn = jnp.einsum("lij,ljk->lik", p["wv"], p["wo"])        # (L, H, H)
    b_attn = jnp.einsum("lij,ljk->lik", p["bv"], p["wo"]) + p["bo"]
    kp["w_attnT"] = jnp.swapaxes(w_attn, -1, -2)                 # (L, H, H)
    kp["b_attnT"] = jnp.swapaxes(b_attn, -1, -2)                 # (L, H, 1)
    kp["ln1_gT"] = jnp.swapaxes(p["ln1_g"], -1, -2)              # (L, H, 1)
    kp["ln1_bT"] = jnp.swapaxes(p["ln1_b"], -1, -2)
    kp["wiT"] = jnp.swapaxes(p["wi"], -1, -2)                    # (L, I, H)
    kp["biT"] = jnp.swapaxes(p["bi"], -1, -2)                    # (L, I, 1)
    kp["w2T"] = jnp.swapaxes(p["w2"], -1, -2)                    # (L, H, I)
    kp["b2T"] = jnp.swapaxes(p["b2"], -1, -2)                    # (L, H, 1)
    kp["ln2_gT"] = jnp.swapaxes(p["ln2_g"], -1, -2)
    kp["ln2_bT"] = jnp.swapaxes(p["ln2_b"], -1, -2)
    # Head: zero-pad the 2 output rows to one sublane group (8).
    kp["w_outT"] = (jnp.zeros((OUT_ROWS, HIDDEN), jnp.float32)
                    .at[:OUT_DIM, :].set(p["w_out"].T))          # (8, H)
    kp["b_outT"] = (jnp.zeros((OUT_ROWS, 1), jnp.float32)
                    .at[:OUT_DIM, :].set(p["b_out"].T))          # (8, 1)
    return kp


def _choose_tile(B, tile_b):
    """Pick the batch tile (lane count per grid step) and padded batch."""
    pB1 = _round_up(max(B, 1), 128)
    # Prefer >= 2 grid steps so ("parallel",) can shard across v7x's two TCs.
    if pB1 >= 256:
        half = _round_up(pl.cdiv(pB1, 2), 128)
    else:
        half = pB1
    tb = max(128, min(tile_b, half))
    pB = _round_up(max(B, 1), tb)
    return tb, pB


def lidar_path_transformer(lidar_scan, current_pos, kernel_params,
                           *, tile_b=DEFAULT_TILE_B):
    if USE_POS and current_pos is not None:
        x = jnp.concatenate([lidar_scan, current_pos], axis=-1)
    else:
        x = lidar_scan
    x = x.astype(jnp.float32)
    B, d_in = x.shape

    tb, pB = _choose_tile(B, tile_b)
    # Transpose so batch maps to lanes; pad batch (columns) to the tile.
    xT = x.T
    if pB != B:
        xT = jnp.pad(xT, ((0, 0), (0, pB - B)))
    grid = (pl.cdiv(pB, tb),)

    kp = kernel_params
    weights = (kp["w_inT"], kp["b_inT"], kp["ln_e_gT"], kp["ln_e_bT"],
               kp["w_attnT"], kp["b_attnT"], kp["ln1_gT"], kp["ln1_bT"],
               kp["wiT"], kp["biT"], kp["w2T"], kp["b2T"],
               kp["ln2_gT"], kp["ln2_bT"], kp["w_outT"], kp["b_outT"])

    def const_spec(shape):
        nd = len(shape)
        # Same block every grid step -> DMA'd once, stays VMEM-resident.
        return pl.BlockSpec(shape, lambda i, _nd=nd: (0,) * _nd)

    in_specs = ([pl.BlockSpec((d_in, tb), lambda i: (0, i))]
                + [const_spec(w.shape) for w in weights])

    out_padded = pl.pallas_call(
        lidar_bert_kernel,
        out_shape=jax.ShapeDtypeStruct((OUT_ROWS, pB), jnp.float32),
        grid=grid,
        in_specs=in_specs,
        out_specs=pl.BlockSpec((OUT_ROWS, tb), lambda i: (0, i)),
        compiler_params=pltpu.CompilerParams(
            dimension_semantics=("parallel",),
            vmem_limit_bytes=32 * 1024 * 1024),
    )(xT, *weights)
    # (OUT_ROWS, pB) -> (B, 2)
    return out_padded[:OUT_DIM, :B].T


def init_params(key):
    """Deterministic synthetic init (BERT-style N(0, 0.02), LN gamma=1/beta=0)."""
    d_in = LIDAR_DIM + (2 if USE_POS else 0)
    L, H, I = NUM_LAYERS, HIDDEN, INTERMEDIATE
    ks = jax.random.split(key, 16)
    std = 0.02

    def nrm(k, shape):
        return std * jax.random.normal(k, shape, jnp.float32)

    p = {}
    p["w_in"] = nrm(ks[0], (d_in, H))
    p["b_in"] = nrm(ks[1], (1, H))
    # position_embeddings[0] + token_type_embeddings[0] (pre-summed here).
    p["emb_add"] = nrm(ks[2], (1, H))
    p["ln_e_g"] = jnp.ones((1, H), jnp.float32)
    p["ln_e_b"] = jnp.zeros((1, H), jnp.float32)
    # Per-layer stacked weights, leading dim = layer.  wq/wk/bq/bk are only
    # used by the pure-JAX reference: for seq_len==1 they cancel exactly and
    # are not consumed by the kernel.
    p["wq"] = nrm(ks[3], (L, H, H)); p["bq"] = nrm(ks[4], (L, 1, H))
    p["wk"] = nrm(ks[5], (L, H, H)); p["bk"] = nrm(ks[6], (L, 1, H))
    p["wv"] = nrm(ks[7], (L, H, H)); p["bv"] = nrm(ks[8], (L, 1, H))
    p["wo"] = nrm(ks[9], (L, H, H)); p["bo"] = nrm(ks[10], (L, 1, H))
    p["ln1_g"] = jnp.ones((L, 1, H), jnp.float32)
    p["ln1_b"] = jnp.zeros((L, 1, H), jnp.float32)
    p["wi"] = nrm(ks[11], (L, H, I)); p["bi"] = nrm(ks[12], (L, 1, I))
    p["w2"] = nrm(ks[13], (L, I, H)); p["b2"] = nrm(ks[14], (L, 1, H))
    p["ln2_g"] = jnp.ones((L, 1, H), jnp.float32)
    p["ln2_b"] = jnp.zeros((L, 1, H), jnp.float32)
    p["w_out"] = nrm(ks[15], (H, OUT_DIM))
    p["b_out"] = jnp.zeros((1, OUT_DIM), jnp.float32)
    return p


def _layernorm_ref(h, g, b):
    """Two-pass LayerNorm, faithful to nn.LayerNorm."""
    mu = jnp.mean(h, axis=-1, keepdims=True)
    var = jnp.mean((h - mu) ** 2, axis=-1, keepdims=True)
    return (h - mu) * lax.rsqrt(var + LN_EPS) * g + b


def reference(lidar_scan, current_pos, p):
    """Pure-JAX mirror of the PyTorch forward, incl. full (Q,K,V) attention."""
    x = jnp.concatenate([lidar_scan, current_pos], axis=-1).astype(jnp.float32)
    B = x.shape[0]
    hd = HIDDEN // NUM_HEADS
    h = x @ p["w_in"] + p["b_in"] + p["emb_add"]
    h = _layernorm_ref(h, p["ln_e_g"], p["ln_e_b"])
    for l in range(NUM_LAYERS):
        q = (h @ p["wq"][l] + p["bq"][l]).reshape(B, NUM_HEADS, 1, hd)
        k = (h @ p["wk"][l] + p["bk"][l]).reshape(B, NUM_HEADS, 1, hd)
        v = (h @ p["wv"][l] + p["bv"][l]).reshape(B, NUM_HEADS, 1, hd)
        s = jnp.einsum("bhqd,bhkd->bhqk", q, k) / jnp.sqrt(float(hd))
        a = jax.nn.softmax(s, axis=-1)            # seq_len 1 -> exactly 1.0
        ctx = jnp.einsum("bhqk,bhkd->bhqd", a, v).reshape(B, HIDDEN)
        attn = ctx @ p["wo"][l] + p["bo"][l]
        h1 = _layernorm_ref(attn + h, p["ln1_g"][l], p["ln1_b"][l])
        inter = h1 @ p["wi"][l] + p["bi"][l]
        inter = 0.5 * inter * (1.0 + lax.erf(inter * INV_SQRT2))
        ffo = inter @ p["w2"][l] + p["b2"][l]
        h = _layernorm_ref(ffo + h1, p["ln2_g"][l], p["ln2_b"][l])
    return h @ p["w_out"] + p["b_out"]


if __name__ == "__main__":
    key = jax.random.PRNGKey(0)
    k_param, k_scan, k_pos = jax.random.split(key, 3)
    params = init_params(k_param)
    kparams = prepare_kernel_params(params)

    B = 2
    lidar_scan = jax.random.uniform(k_scan, (B, LIDAR_DIM), jnp.float32, 0.0, 10.0)
    current_pos = jax.random.normal(k_pos, (B, 2), jnp.float32)

    out = lidar_path_transformer(lidar_scan, current_pos, kparams)
    out = jax.block_until_ready(out)
    assert out.shape == (B, OUT_DIM) and out.dtype == jnp.float32

    ref = reference(lidar_scan, current_pos, params)
    assert jnp.allclose(out, ref, atol=1e-4, rtol=1e-4), (out, ref)
    print("KERNEL_OK")
</pallas_src>

<mosaic_0001>
module attributes {stable_mosaic.version = 11 : i64} {
  func.func @lidar_bert_kernel(%arg0: i32, %arg1: memref<16x128xf32, #tpu.memory_space<vmem>>, %arg2: memref<32x16xf32, #tpu.memory_space<vmem>>, %arg3: memref<32x1xf32, #tpu.memory_space<vmem>>, %arg4: memref<32x1xf32, #tpu.memory_space<vmem>>, %arg5: memref<32x1xf32, #tpu.memory_space<vmem>>, %arg6: memref<2x32x32xf32, #tpu.memory_space<vmem>>, %arg7: memref<2x32x1xf32, #tpu.memory_space<vmem>>, %arg8: memref<2x32x1xf32, #tpu.memory_space<vmem>>, %arg9: memref<2x32x1xf32, #tpu.memory_space<vmem>>, %arg10: memref<2x128x32xf32, #tpu.memory_space<vmem>>, %arg11: memref<2x128x1xf32, #tpu.memory_space<vmem>>, %arg12: memref<2x32x128xf32, #tpu.memory_space<vmem>>, %arg13: memref<2x32x1xf32, #tpu.memory_space<vmem>>, %arg14: memref<2x32x1xf32, #tpu.memory_space<vmem>>, %arg15: memref<2x32x1xf32, #tpu.memory_space<vmem>>, %arg16: memref<8x32xf32, #tpu.memory_space<vmem>>, %arg17: memref<8x1xf32, #tpu.memory_space<vmem>>, %arg18: memref<8x128xf32, #tpu.memory_space<vmem>>) attributes {dimension_semantics = [#tpu.dimension_semantics<parallel>], iteration_bounds = array<i64: 1>, scalar_prefetch = 0 : i64, scratch_operands = 0 : i64, tpu.core_type = #tpu.core_type<tc>, window_params = [{transform_indices = @transform_0, window_bounds = array<i64: 16, 128>}, {pipeline_mode = #tpu.pipeline_mode<synchronous>, transform_indices = @transform_1, window_bounds = array<i64: 32, 16>}, {pipeline_mode = #tpu.pipeline_mode<synchronous>, transform_indices = @transform_2, window_bounds = array<i64: 32, 1>}, {pipeline_mode = #tpu.pipeline_mode<synchronous>, transform_indices = @transform_3, window_bounds = array<i64: 32, 1>}, {pipeline_mode = #tpu.pipeline_mode<synchronous>, transform_indices = @transform_4, window_bounds = array<i64: 32, 1>}, {pipeline_mode = #tpu.pipeline_mode<synchronous>, transform_indices = @transform_5, window_bounds = array<i64: 2, 32, 32>}, {pipeline_mode = #tpu.pipeline_mode<synchronous>, transform_indices = @transform_6, window_bounds = array<i64: 2, 32, 1>}, {pipeline_mode = #tpu.pipeline_mode<synchronous>, transform_indices = @transform_7, window_bounds = array<i64: 2, 32, 1>}, {pipeline_mode = #tpu.pipeline_mode<synchronous>, transform_indices = @transform_8, window_bounds = array<i64: 2, 32, 1>}, {pipeline_mode = #tpu.pipeline_mode<synchronous>, transform_indices = @transform_9, window_bounds = array<i64: 2, 128, 32>}, {pipeline_mode = #tpu.pipeline_mode<synchronous>, transform_indices = @transform_10, window_bounds = array<i64: 2, 128, 1>}, {pipeline_mode = #tpu.pipeline_mode<synchronous>, transform_indices = @transform_11, window_bounds = array<i64: 2, 32, 128>}, {pipeline_mode = #tpu.pipeline_mode<synchronous>, transform_indices = @transform_12, window_bounds = array<i64: 2, 32, 1>}, {pipeline_mode = #tpu.pipeline_mode<synchronous>, transform_indices = @transform_13, window_bounds = array<i64: 2, 32, 1>}, {pipeline_mode = #tpu.pipeline_mode<synchronous>, transform_indices = @transform_14, window_bounds = array<i64: 2, 32, 1>}, {pipeline_mode = #tpu.pipeline_mode<synchronous>, transform_indices = @transform_15, window_bounds = array<i64: 8, 32>}, {pipeline_mode = #tpu.pipeline_mode<synchronous>, transform_indices = @transform_16, window_bounds = array<i64: 8, 1>}, {transform_indices = @transform_17, window_bounds = array<i64: 8, 128>}]} {
    %c0 = arith.constant 0 : index
    %c0_0 = arith.constant 0 : index
    %0 = vector.load %arg2[%c0, %c0_0] : memref<32x16xf32, #tpu.memory_space<vmem>>, vector<32x16xf32>
    %c0_1 = arith.constant 0 : index
    %c0_2 = arith.constant 0 : index
    %1 = vector.load %arg1[%c0_1, %c0_2] : memref<16x128xf32, #tpu.memory_space<vmem>>, vector<16x128xf32>
    %cst = arith.constant dense<0.000000e+00> : vector<32x128xf32>
    %2 = tpu.matmul %0, %1, %cst {dimension_numbers = #tpu.dot_dimension_numbers<[1], [0], [0], [1], [0, 0, 1, 1], [], []>} : vector<32x16xf32>, vector<16x128xf32>, vector<32x128xf32> -> vector<32x128xf32>
    %c0_3 = arith.constant 0 : index
    %c0_4 = arith.constant 0 : index
    %3 = vector.load %arg3[%c0_3, %c0_4] : memref<32x1xf32, #tpu.memory_space<vmem>>, vector<32x1xf32>
    %4 = vector.broadcast %3 : vector<32x1xf32> to vector<32x128xf32>
    %5 = arith.addf %2, %4 : vector<32x128xf32>
    %c0_5 = arith.constant 0 : index
    %c0_6 = arith.constant 0 : index
    %6 = vector.load %arg4[%c0_5, %c0_6] : memref<32x1xf32, #tpu.memory_space<vmem>>, vector<32x1xf32>
    %c0_7 = arith.constant 0 : index
    %c0_8 = arith.constant 0 : index
    %7 = vector.load %arg5[%c0_7, %c0_8] : memref<32x1xf32, #tpu.memory_space<vmem>>, vector<32x1xf32>
    %cst_9 = arith.constant dense<0.000000e+00> : vector<128xf32>
    %8 = vector.multi_reduction <add>, %5, %cst_9 [0] : vector<32x128xf32> to vector<128xf32>
    %9 = vector.shape_cast %8 : vector<128xf32> to vector<1x128xf32>
    %cst_10 = arith.constant 3.200000e+01 : f32
    %10 = vector.broadcast %cst_10 : f32 to vector<1x128xf32>
    %11 = arith.divf %9, %10 : vector<1x128xf32>
    %12 = arith.mulf %5, %5 : vector<32x128xf32>
    %cst_11 = arith.constant dense<0.000000e+00> : vector<128xf32>
    %13 = vector.multi_reduction <add>, %12, %cst_11 [0] : vector<32x128xf32> to vector<128xf32>
    %14 = vector.shape_cast %13 : vector<128xf32> to vector<1x128xf32>
    %cst_12 = arith.constant 3.200000e+01 : f32
    %15 = vector.broadcast %cst_12 : f32 to vector<1x128xf32>
    %16 = arith.divf %14, %15 : vector<1x128xf32>
    %17 = arith.mulf %11, %11 : vector<1x128xf32>
    %18 = arith.subf %16, %17 : vector<1x128xf32>
    %cst_13 = arith.constant 0.000000e+00 : f32
    %19 = vector.broadcast %cst_13 : f32 to vector<1x128xf32>
    %20 = arith.maximumf %18, %19 : vector<1x128xf32>
    %21 = vector.broadcast %11 : vector<1x128xf32> to vector<32x128xf32>
    %22 = arith.subf %5, %21 : vector<32x128xf32>
    %cst_14 = arith.constant 9.99999996E-13 : f32
    %23 = vector.broadcast %cst_14 : f32 to vector<1x128xf32>
    %24 = arith.addf %20, %23 : vector<1x128xf32>
    %25 = math.rsqrt %24 : vector<1x128xf32>
    %26 = vector.broadcast %25 : vector<1x128xf32> to vector<32x128xf32>
    %27 = arith.mulf %22, %26 : vector<32x128xf32>
    %28 = vector.broadcast %6 : vector<32x1xf32> to vector<32x128xf32>
    %29 = arith.mulf %27, %28 : vector<32x128xf32>
    %30 = vector.broadcast %7 : vector<32x1xf32> to vector<32x128xf32>
    %31 = arith.addf %29, %30 : vector<32x128xf32>
    %c0_15 = arith.constant 0 : index
    %c0_16 = arith.constant 0 : index
    %c0_17 = arith.constant 0 : index
    %32 = vector.load %arg6[%c0_15, %c0_16, %c0_17] : memref<2x32x32xf32, #tpu.memory_space<vmem>>, vector<1x32x32xf32>
    %33 = vector.shape_cast %32 : vector<1x32x32xf32> to vector<32x32xf32>
    %cst_18 = arith.constant dense<0.000000e+00> : vector<32x128xf32>
    %34 = tpu.matmul %33, %31, %cst_18 {dimension_numbers = #tpu.dot_dimension_numbers<[1], [0], [0], [1], [0, 0, 1, 1], [], []>} : vector<32x32xf32>, vector<32x128xf32>, vector<32x128xf32> -> vector<32x128xf32>
    %c0_19 = arith.constant 0 : index
    %c0_20 = arith.constant 0 : index
    %c0_21 = arith.constant 0 : index
    %35 = vector.load %arg7[%c0_19, %c0_20, %c0_21] : memref<2x32x1xf32, #tpu.memory_space<vmem>>, vector<1x32x1xf32>
    %36 = vector.shape_cast %35 : vector<1x32x1xf32> to vector<32x1xf32>
    %37 = vector.broadcast %36 : vector<32x1xf32> to vector<32x128xf32>
    %38 = arith.addf %34, %37 : vector<32x128xf32>
    %39 = arith.addf %38, %31 : vector<32x128xf32>
    %c0_22 = arith.constant 0 : index
    %c0_23 = arith.constant 0 : index
    %c0_24 = arith.constant 0 : index
    %40 = vector.load %arg8[%c0_22, %c0_23, %c0_24] : memref<2x32x1xf32, #tpu.memory_space<vmem>>, vector<1x32x1xf32>
    %41 = vector.shape_cast %40 : vector<1x32x1xf32> to vector<32x1xf32>
    %c0_25 = arith.constant 0 : index
    %c0_26 = arith.constant 0 : index
    %c0_27 = arith.constant 0 : index
    %42 = vector.load %arg9[%c0_25, %c0_26, %c0_27] : memref<2x32x1xf32, #tpu.memory_space<vmem>>, vector<1x32x1xf32>
    %43 = vector.shape_cast %42 : vector<1x32x1xf32> to vector<32x1xf32>
    %cst_28 = arith.constant dense<0.000000e+00> : vector<128xf32>
    %44 = vector.multi_reduction <add>, %39, %cst_28 [0] : vector<32x128xf32> to vector<128xf32>
    %45 = vector.shape_cast %44 : vector<128xf32> to vector<1x128xf32>
    %cst_29 = arith.constant 3.200000e+01 : f32
    %46 = vector.broadcast %cst_29 : f32 to vector<1x128xf32>
    %47 = arith.divf %45, %46 : vector<1x128xf32>
    %48 = arith.mulf %39, %39 : vector<32x128xf32>
    %cst_30 = arith.constant dense<0.000000e+00> : vector<128xf32>
    %49 = vector.multi_reduction <add>, %48, %cst_30 [0] : vector<32x128xf32> to vector<128xf32>
    %50 = vector.shape_cast %49 : vector<128xf32> to vector<1x128xf32>
    %cst_31 = arith.constant 3.200000e+01 : f32
    %51 = vector.broadcast %cst_31 : f32 to vector<1x128xf32>
    %52 = arith.divf %50, %51 : vector<1x128xf32>
    %53 = arith.mulf %47, %47 : vector<1x128xf32>
    %54 = arith.subf %52, %53 : vector<1x128xf32>
    %cst_32 = arith.constant 0.000000e+00 : f32
    %55 = vector.broadcast %cst_32 : f32 to vector<1x128xf32>
    %56 = arith.maximumf %54, %55 : vector<1x128xf32>
    %57 = vector.broadcast %47 : vector<1x128xf32> to vector<32x128xf32>
    %58 = arith.subf %39, %57 : vector<32x128xf32>
    %cst_33 = arith.constant 9.99999996E-13 : f32
    %59 = vector.broadcast %cst_33 : f32 to vector<1x128xf32>
    %60 = arith.addf %56, %59 : vector<1x128xf32>
    %61 = math.rsqrt %60 : vector<1x128xf32>
    %62 = vector.broadcast %61 : vector<1x128xf32> to vector<32x128xf32>
    %63 = arith.mulf %58, %62 : vector<32x128xf32>
    %64 = vector.broadcast %41 : vector<32x1xf32> to vector<32x128xf32>
    %65 = arith.mulf %63, %64 : vector<32x128xf32>
    %66 = vector.broadcast %43 : vector<32x1xf32> to vector<32x128xf32>
    %67 = arith.addf %65, %66 : vector<32x128xf32>
    %c0_34 = arith.constant 0 : index
    %c0_35 = arith.constant 0 : index
    %c0_36 = arith.constant 0 : index
    %68 = vector.load %arg10[%c0_34, %c0_35, %c0_36] : memref<2x128x32xf32, #tpu.memory_space<vmem>>, vector<1x128x32xf32>
    %69 = vector.shape_cast %68 : vector<1x128x32xf32> to vector<128x32xf32>
    %cst_37 = arith.constant dense<0.000000e+00> : vector<128x128xf32>
    %70 = tpu.matmul %69, %67, %cst_37 {dimension_numbers = #tpu.dot_dimension_numbers<[1], [0], [0], [1], [0, 0, 1, 1], [], []>} : vector<128x32xf32>, vector<32x128xf32>, vector<128x128xf32> -> vector<128x128xf32>
    %c0_38 = arith.constant 0 : index
    %c0_39 = arith.constant 0 : index
    %c0_40 = arith.constant 0 : index
    %71 = vector.load %arg11[%c0_38, %c0_39, %c0_40] : memref<2x128x1xf32, #tpu.memory_space<vmem>>, vector<1x128x1xf32>
    %72 = vector.shape_cast %71 : vector<1x128x1xf32> to vector<128x1xf32>
    %73 = vector.broadcast %72 : vector<128x1xf32> to vector<128x128xf32>
    %74 = arith.addf %70, %73 : vector<128x128xf32>
    %cst_41 = arith.constant 5.000000e-01 : f32
    %75 = vector.broadcast %cst_41 : f32 to vector<128x128xf32>
    %76 = arith.mulf %75, %74 : vector<128x128xf32>
    %cst_42 = arith.constant 0.707106769 : f32
    %77 = vector.broadcast %cst_42 : f32 to vector<128x128xf32>
    %78 = arith.mulf %74, %77 : vector<128x128xf32>
    %79 = math.erf %78 : vector<128x128xf32>
    %cst_43 = arith.constant 1.000000e+00 : f32
    %80 = vector.broadcast %cst_43 : f32 to vector<128x128xf32>
    %81 = arith.addf %80, %79 : vector<128x128xf32>
    %82 = arith.mulf %76, %81 : vector<128x128xf32>
    %c0_44 = arith.constant 0 : index
    %c0_45 = arith.constant 0 : index
    %c0_46 = arith.constant 0 : index
    %83 = vector.load %arg12[%c0_44, %c0_45, %c0_46] : memref<2x32x128xf32, #tpu.memory_space<vmem>>, vector<1x32x128xf32>
    %84 = vector.shape_cast %83 : vector<1x32x128xf32> to vector<32x128xf32>
    %cst_47 = arith.constant dense<0.000000e+00> : vector<32x128xf32>
    %85 = tpu.matmul %84, %82, %cst_47 {dimension_numbers = #tpu.dot_dimension_numbers<[1], [0], [0], [1], [0, 0, 1, 1], [], []>} : vector<32x128xf32>, vector<128x128xf32>, vector<32x128xf32> -> vector<32x128xf32>
    %c0_48 = arith.constant 0 : index
    %c0_49 = arith.constant 0 : index
    %c0_50 = arith.constant 0 : index
    %86 = vector.load %arg13[%c0_48, %c0_49, %c0_50] : memref<2x32x1xf32, #tpu.memory_space<vmem>>, vector<1x32x1xf32>
    %87 = vector.shape_cast %86 : vector<1x32x1xf32> to vector<32x1xf32>
    %88 = vector.broadcast %87 : vector<32x1xf32> to vector<32x128xf32>
    %89 = arith.addf %85, %88 : vector<32x128xf32>
    %90 = arith.addf %89, %67 : vector<32x128xf32>
    %c0_51 = arith.constant 0 : index
    %c0_52 = arith.constant 0 : index
    %c0_53 = arith.constant 0 : index
    %91 = vector.load %arg14[%c0_51, %c0_52, %c0_53] : memref<2x32x1xf32, #tpu.memory_space<vmem>>, vector<1x32x1xf32>
    %92 = vector.shape_cast %91 : vector<1x32x1xf32> to vector<32x1xf32>
    %c0_54 = arith.constant 0 : index
    %c0_55 = arith.constant 0 : index
    %c0_56 = arith.constant 0 : index
    %93 = vector.load %arg15[%c0_54, %c0_55, %c0_56] : memref<2x32x1xf32, #tpu.memory_space<vmem>>, vector<1x32x1xf32>
    %94 = vector.shape_cast %93 : vector<1x32x1xf32> to vector<32x1xf32>
    %cst_57 = arith.constant dense<0.000000e+00> : vector<128xf32>
    %95 = vector.multi_reduction <add>, %90, %cst_57 [0] : vector<32x128xf32> to vector<128xf32>
    %96 = vector.shape_cast %95 : vector<128xf32> to vector<1x128xf32>
    %cst_58 = arith.constant 3.200000e+01 : f32
    %97 = vector.broadcast %cst_58 : f32 to vector<1x128xf32>
    %98 = arith.divf %96, %97 : vector<1x128xf32>
    %99 = arith.mulf %90, %90 : vector<32x128xf32>
    %cst_59 = arith.constant dense<0.000000e+00> : vector<128xf32>
    %100 = vector.multi_reduction <add>, %99, %cst_59 [0] : vector<32x128xf32> to vector<128xf32>
    %101 = vector.shape_cast %100 : vector<128xf32> to vector<1x128xf32>
    %cst_60 = arith.constant 3.200000e+01 : f32
    %102 = vector.broadcast %cst_60 : f32 to vector<1x128xf32>
    %103 = arith.divf %101, %102 : vector<1x128xf32>
    %104 = arith.mulf %98, %98 : vector<1x128xf32>
    %105 = arith.subf %103, %104 : vector<1x128xf32>
    %cst_61 = arith.constant 0.000000e+00 : f32
    %106 = vector.broadcast %cst_61 : f32 to vector<1x128xf32>
    %107 = arith.maximumf %105, %106 : vector<1x128xf32>
    %108 = vector.broadcast %98 : vector<1x128xf32> to vector<32x128xf32>
    %109 = arith.subf %90, %108 : vector<32x128xf32>
    %cst_62 = arith.constant 9.99999996E-13 : f32
    %110 = vector.broadcast %cst_62 : f32 to vector<1x128xf32>
    %111 = arith.addf %107, %110 : vector<1x128xf32>
    %112 = math.rsqrt %111 : vector<1x128xf32>
    %113 = vector.broadcast %112 : vector<1x128xf32> to vector<32x128xf32>
    %114 = arith.mulf %109, %113 : vector<32x128xf32>
    %115 = vector.broadcast %92 : vector<32x1xf32> to vector<32x128xf32>
    %116 = arith.mulf %114, %115 : vector<32x128xf32>
    %117 = vector.broadcast %94 : vector<32x1xf32> to vector<32x128xf32>
    %118 = arith.addf %116, %117 : vector<32x128xf32>
    %c1 = arith.constant 1 : index
    %c0_63 = arith.constant 0 : index
    %c0_64 = arith.constant 0 : index
    %119 = vector.load %arg6[%c1, %c0_63, %c0_64] : memref<2x32x32xf32, #tpu.memory_space<vmem>>, vector<1x32x32xf32>
    %120 = vector.shape_cast %119 : vector<1x32x32xf32> to vector<32x32xf32>
    %cst_65 = arith.constant dense<0.000000e+00> : vector<32x128xf32>
    %121 = tpu.matmul %120, %118, %cst_65 {dimension_numbers = #tpu.dot_dimension_numbers<[1], [0], [0], [1], [0, 0, 1, 1], [], []>} : vector<32x32xf32>, vector<32x128xf32>, vector<32x128xf32> -> vector<32x128xf32>
    %c1_66 = arith.constant 1 : index
    %c0_67 = arith.constant 0 : index
    %c0_68 = arith.constant 0 : index
    %122 = vector.load %arg7[%c1_66, %c0_67, %c0_68] : memref<2x32x1xf32, #tpu.memory_space<vmem>>, vector<1x32x1xf32>
    %123 = vector.shape_cast %122 : vector<1x32x1xf32> to vector<32x1xf32>
    %124 = vector.broadcast %123 : vector<32x1xf32> to vector<32x128xf32>
    %125 = arith.addf %121, %124 : vector<32x128xf32>
    %126 = arith.addf %125, %118 : vector<32x128xf32>
    %c1_69 = arith.constant 1 : index
    %c0_70 = arith.constant 0 : index
    %c0_71 = arith.constant 0 : index
    %127 = vector.load %arg8[%c1_69, %c0_70, %c0_71] : memref<2x32x1xf32, #tpu.memory_space<vmem>>, vector<1x32x1xf32>
    %128 = vector.shape_cast %127 : vector<1x32x1xf32> to vector<32x1xf32>
    %c1_72 = arith.constant 1 : index
    %c0_73 = arith.constant 0 : index
    %c0_74 = arith.constant 0 : index
    %129 = vector.load %arg9[%c1_72, %c0_73, %c0_74] : memref<2x32x1xf32, #tpu.memory_space<vmem>>, vector<1x32x1xf32>
    %130 = vector.shape_cast %129 : vector<1x32x1xf32> to vector<32x1xf32>
    %cst_75 = arith.constant dense<0.000000e+00> : vector<128xf32>
    %131 = vector.multi_reduction <add>, %126, %cst_75 [0] : vector<32x128xf32> to vector<128xf32>
    %132 = vector.shape_cast %131 : vector<128xf32> to vector<1x128xf32>
    %cst_76 = arith.constant 3.200000e+01 : f32
    %133 = vector.broadcast %cst_76 : f32 to vector<1x128xf32>
    %134 = arith.divf %132, %133 : vector<1x128xf32>
    %135 = arith.mulf %126, %126 : vector<32x128xf32>
    %cst_77 = arith.constant dense<0.000000e+00> : vector<128xf32>
    %136 = vector.multi_reduction <add>, %135, %cst_77 [0] : vector<32x128xf32> to vector<128xf32>
    %137 = vector.shape_cast %136 : vector<128xf32> to vector<1x128xf32>
    %cst_78 = arith.constant 3.200000e+01 : f32
    %138 = vector.broadcast %cst_78 : f32 to vector<1x128xf32>
    %139 = arith.divf %137, %138 : vector<1x128xf32>
    %140 = arith.mulf %134, %134 : vector<1x128xf32>
    %141 = arith.subf %139, %140 : vector<1x128xf32>
    %cst_79 = arith.constant 0.000000e+00 : f32
    %142 = vector.broadcast %cst_79 : f32 to vector<1x128xf32>
    %143 = arith.maximumf %141, %142 : vector<1x128xf32>
    %144 = vector.broadcast %134 : vector<1x128xf32> to vector<32x128xf32>
    %145 = arith.subf %126, %144 : vector<32x128xf32>
    %cst_80 = arith.constant 9.99999996E-13 : f32
    %146 = vector.broadcast %cst_80 : f32 to vector<1x128xf32>
    %147 = arith.addf %143, %146 : vector<1x128xf32>
    %148 = math.rsqrt %147 : vector<1x128xf32>
    %149 = vector.broadcast %148 : vector<1x128xf32> to vector<32x128xf32>
    %150 = arith.mulf %145, %149 : vector<32x128xf32>
    %151 = vector.broadcast %128 : vector<32x1xf32> to vector<32x128xf32>
    %152 = arith.mulf %150, %151 : vector<32x128xf32>
    %153 = vector.broadcast %130 : vector<32x1xf32> to vector<32x128xf32>
    %154 = arith.addf %152, %153 : vector<32x128xf32>
    %c1_81 = arith.constant 1 : index
    %c0_82 = arith.constant 0 : index
    %c0_83 = arith.constant 0 : index
    %155 = vector.load %arg10[%c1_81, %c0_82, %c0_83] : memref<2x128x32xf32, #tpu.memory_space<vmem>>, vector<1x128x32xf32>
    %156 = vector.shape_cast %155 : vector<1x128x32xf32> to vector<128x32xf32>
    %cst_84 = arith.constant dense<0.000000e+00> : vector<128x128xf32>
    %157 = tpu.matmul %156, %154, %cst_84 {dimension_numbers = #tpu.dot_dimension_numbers<[1], [0], [0], [1], [0, 0, 1, 1], [], []>} : vector<128x32xf32>, vector<32x128xf32>, vector<128x128xf32> -> vector<128x128xf32>
    %c1_85 = arith.constant 1 : index
    %c0_86 = arith.constant 0 : index
    %c0_87 = arith.constant 0 : index
    %158 = vector.load %arg11[%c1_85, %c0_86, %c0_87] : memref<2x128x1xf32, #tpu.memory_space<vmem>>, vector<1x128x1xf32>
    %159 = vector.shape_cast %158 : vector<1x128x1xf32> to vector<128x1xf32>
    %160 = vector.broadcast %159 : vector<128x1xf32> to vector<128x128xf32>
    %161 = arith.addf %157, %160 : vector<128x128xf32>
    %cst_88 = arith.constant 5.000000e-01 : f32
    %162 = vector.broadcast %cst_88 : f32 to vector<128x128xf32>
    %163 = arith.mulf %162, %161 : vector<128x128xf32>
    %cst_89 = arith.constant 0.707106769 : f32
    %164 = vector.broadcast %cst_89 : f32 to vector<128x128xf32>
    %165 = arith.mulf %161, %164 : vector<128x128xf32>
    %166 = math.erf %165 : vector<128x128xf32>
    %cst_90 = arith.constant 1.000000e+00 : f32
    %167 = vector.broadcast %cst_90 : f32 to vector<128x128xf32>
    %168 = arith.addf %167, %166 : vector<128x128xf32>
    %169 = arith.mulf %163, %168 : vector<128x128xf32>
    %c1_91 = arith.constant 1 : index
    %c0_92 = arith.constant 0 : index
    %c0_93 = arith.constant 0 : index
    %170 = vector.load %arg12[%c1_91, %c0_92, %c0_93] : memref<2x32x128xf32, #tpu.memory_space<vmem>>, vector<1x32x128xf32>
    %171 = vector.shape_cast %170 : vector<1x32x128xf32> to vector<32x128xf32>
    %cst_94 = arith.constant dense<0.000000e+00> : vector<32x128xf32>
    %172 = tpu.matmul %171, %169, %cst_94 {dimension_numbers = #tpu.dot_dimension_numbers<[1], [0], [0], [1], [0, 0, 1, 1], [], []>} : vector<32x128xf32>, vector<128x128xf32>, vector<32x128xf32> -> vector<32x128xf32>
    %c1_95 = arith.constant 1 : index
    %c0_96 = arith.constant 0 : index
    %c0_97 = arith.constant 0 : index
    %173 = vector.load %arg13[%c1_95, %c0_96, %c0_97] : memref<2x32x1xf32, #tpu.memory_space<vmem>>, vector<1x32x1xf32>
    %174 = vector.shape_cast %173 : vector<1x32x1xf32> to vector<32x1xf32>
    %175 = vector.broadcast %174 : vector<32x1xf32> to vector<32x128xf32>
    %176 = arith.addf %172, %175 : vector<32x128xf32>
    %177 = arith.addf %176, %154 : vector<32x128xf32>
    %c1_98 = arith.constant 1 : index
    %c0_99 = arith.constant 0 : index
    %c0_100 = arith.constant 0 : index
    %178 = vector.load %arg14[%c1_98, %c0_99, %c0_100] : memref<2x32x1xf32, #tpu.memory_space<vmem>>, vector<1x32x1xf32>
    %179 = vector.shape_cast %178 : vector<1x32x1xf32> to vector<32x1xf32>
    %c1_101 = arith.constant 1 : index
    %c0_102 = arith.constant 0 : index
    %c0_103 = arith.constant 0 : index
    %180 = vector.load %arg15[%c1_101, %c0_102, %c0_103] : memref<2x32x1xf32, #tpu.memory_space<vmem>>, vector<1x32x1xf32>
    %181 = vector.shape_cast %180 : vector<1x32x1xf32> to vector<32x1xf32>
    %cst_104 = arith.constant dense<0.000000e+00> : vector<128xf32>
    %182 = vector.multi_reduction <add>, %177, %cst_104 [0] : vector<32x128xf32> to vector<128xf32>
    %183 = vector.shape_cast %182 : vector<128xf32> to vector<1x128xf32>
    %cst_105 = arith.constant 3.200000e+01 : f32
    %184 = vector.broadcast %cst_105 : f32 to vector<1x128xf32>
    %185 = arith.divf %183, %184 : vector<1x128xf32>
    %186 = arith.mulf %177, %177 : vector<32x128xf32>
    %cst_106 = arith.constant dense<0.000000e+00> : vector<128xf32>
    %187 = vector.multi_reduction <add>, %186, %cst_106 [0] : vector<32x128xf32> to vector<128xf32>
    %188 = vector.shape_cast %187 : vector<128xf32> to vector<1x128xf32>
    %cst_107 = arith.constant 3.200000e+01 : f32
    %189 = vector.broadcast %cst_107 : f32 to vector<1x128xf32>
    %190 = arith.divf %188, %189 : vector<1x128xf32>
    %191 = arith.mulf %185, %185 : vector<1x128xf32>
    %192 = arith.subf %190, %191 : vector<1x128xf32>
    %cst_108 = arith.constant 0.000000e+00 : f32
    %193 = vector.broadcast %cst_108 : f32 to vector<1x128xf32>
    %194 = arith.maximumf %192, %193 : vector<1x128xf32>
    %195 = vector.broadcast %185 : vector<1x128xf32> to vector<32x128xf32>
    %196 = arith.subf %177, %195 : vector<32x128xf32>
    %cst_109 = arith.constant 9.99999996E-13 : f32
    %197 = vector.broadcast %cst_109 : f32 to vector<1x128xf32>
    %198 = arith.addf %194, %197 : vector<1x128xf32>
    %199 = math.rsqrt %198 : vector<1x128xf32>
    %200 = vector.broadcast %199 : vector<1x128xf32> to vector<32x128xf32>
    %201 = arith.mulf %196, %200 : vector<32x128xf32>
    %202 = vector.broadcast %179 : vector<32x1xf32> to vector<32x128xf32>
    %203 = arith.mulf %201, %202 : vector<32x128xf32>
    %204 = vector.broadcast %181 : vector<32x1xf32> to vector<32x128xf32>
    %205 = arith.addf %203, %204 : vector<32x128xf32>
    %c0_110 = arith.constant 0 : index
    %c0_111 = arith.constant 0 : index
    %206 = vector.load %arg16[%c0_110, %c0_111] : memref<8x32xf32, #tpu.memory_space<vmem>>, vector<8x32xf32>
    %cst_112 = arith.constant dense<0.000000e+00> : vector<8x128xf32>
    %207 = tpu.matmul %206, %205, %cst_112 {dimension_numbers = #tpu.dot_dimension_numbers<[1], [0], [0], [1], [0, 0, 1, 1], [], []>} : vector<8x32xf32>, vector<32x128xf32>, vector<8x128xf32> -> vector<8x128xf32>
    %c0_113 = arith.constant 0 : index
    %c0_114 = arith.constant 0 : index
    %208 = vector.load %arg17[%c0_113, %c0_114] : memref<8x1xf32, #tpu.memory_space<vmem>>, vector<8x1xf32>
    %209 = vector.broadcast %208 : vector<8x1xf32> to vector<8x128xf32>
    %210 = arith.addf %207, %209 : vector<8x128xf32>
    %c0_115 = arith.constant 0 : index
    %c0_116 = arith.constant 0 : index
    %211 = vector.load %arg18[%c0_115, %c0_116] : memref<8x128xf32, #tpu.memory_space<vmem>>, vector<8x128xf32>
    tpu.vector_store %arg18[%c0_115, %c0_116], %210 {strides = array<i32>} : memref<8x128xf32, #tpu.memory_space<vmem>>, vector<8x128xf32>,
    return
  }
  func.func @transform_0(%arg0: i32) -> (i32, i32) {
    %c0_i32 = arith.constant 0 : i32
    %c0_i32_0 = arith.constant 0 : i32
    return %c0_i32, %arg0 : i32, i32
  }
  func.func @transform_1(%arg0: i32) -> (i32, i32) {
    %c0_i32 = arith.constant 0 : i32
    %c0_i32_0 = arith.constant 0 : i32
    %c0_i32_1 = arith.constant 0 : i32
    return %c0_i32, %c0_i32_0 : i32, i32
  }
  func.func @transform_2(%arg0: i32) -> (i32, i32) {
    %c0_i32 = arith.constant 0 : i32
    %c0_i32_0 = arith.constant 0 : i32
    %c0_i32_1 = arith.constant 0 : i32
    return %c0_i32, %c0_i32_0 : i32, i32
  }
  func.func @transform_3(%arg0: i32) -> (i32, i32) {
    %c0_i32 = arith.constant 0 : i32
    %c0_i32_0 = arith.constant 0 : i32
    %c0_i32_1 = arith.constant 0 : i32
    return %c0_i32, %c0_i32_0 : i32, i32
  }
  func.func @transform_4(%arg0: i32) -> (i32, i32) {
    %c0_i32 = arith.constant 0 : i32
    %c0_i32_0 = arith.constant 0 : i32
    %c0_i32_1 = arith.constant 0 : i32
    return %c0_i32, %c0_i32_0 : i32, i32
  }
  func.func @transform_5(%arg0: i32) -> (i32, i32, i32) {
    %c0_i32 = arith.constant 0 : i32
    %c0_i32_0 = arith.constant 0 : i32
    %c0_i32_1 = arith.constant 0 : i32
    %c0_i32_2 = arith.constant 0 : i32
    return %c0_i32, %c0_i32_0, %c0_i32_1 : i32, i32, i32
  }
  func.func @transform_6(%arg0: i32) -> (i32, i32, i32) {
    %c0_i32 = arith.constant 0 : i32
    %c0_i32_0 = arith.constant 0 : i32
    %c0_i32_1 = arith.constant 0 : i32
    %c0_i32_2 = arith.constant 0 : i32
    return %c0_i32, %c0_i32_0, %c0_i32_1 : i32, i32, i32
  }
  func.func @transform_7(%arg0: i32) -> (i32, i32, i32) {
    %c0_i32 = arith.constant 0 : i32
    %c0_i32_0 = arith.constant 0 : i32
    %c0_i32_1 = arith.constant 0 : i32
    %c0_i32_2 = arith.constant 0 : i32
    return %c0_i32, %c0_i32_0, %c0_i32_1 : i32, i32, i32
  }
  func.func @transform_8(%arg0: i32) -> (i32, i32, i32) {
    %c0_i32 = arith.constant 0 : i32
    %c0_i32_0 = arith.constant 0 : i32
    %c0_i32_1 = arith.constant 0 : i32
    %c0_i32_2 = arith.constant 0 : i32
    return %c0_i32, %c0_i32_0, %c0_i32_1 : i32, i32, i32
  }
  func.func @transform_9(%arg0: i32) -> (i32, i32, i32) {
    %c0_i32 = arith.constant 0 : i32
    %c0_i32_0 = arith.constant 0 : i32
    %c0_i32_1 = arith.constant 0 : i32
    %c0_i32_2 = arith.constant 0 : i32
    return %c0_i32, %c0_i32_0, %c0_i32_1 : i32, i32, i32
  }
  func.func @transform_10(%arg0: i32) -> (i32, i32, i32) {
    %c0_i32 = arith.constant 0 : i32
    %c0_i32_0 = arith.constant 0 : i32
    %c0_i32_1 = arith.constant 0 : i32
    %c0_i32_2 = arith.constant 0 : i32
    return %c0_i32, %c0_i32_0, %c0_i32_1 : i32, i32, i32
  }
  func.func @transform_11(%arg0: i32) -> (i32, i32, i32) {
    %c0_i32 = arith.constant 0 : i32
    %c0_i32_0 = arith.constant 0 : i32
    %c0_i32_1 = arith.constant 0 : i32
    %c0_i32_2 = arith.constant 0 : i32
    return %c0_i32, %c0_i32_0, %c0_i32_1 : i32, i32, i32
  }
  func.func @transform_12(%arg0: i32) -> (i32, i32, i32) {
    %c0_i32 = arith.constant 0 : i32
    %c0_i32_0 = arith.constant 0 : i32
    %c0_i32_1 = arith.constant 0 : i32
    %c0_i32_2 = arith.constant 0 : i32
    return %c0_i32, %c0_i32_0, %c0_i32_1 : i32, i32, i32
  }
  func.func @transform_13(%arg0: i32) -> (i32, i32, i32) {
    %c0_i32 = arith.constant 0 : i32
    %c0_i32_0 = arith.constant 0 : i32
    %c0_i32_1 = arith.constant 0 : i32
    %c0_i32_2 = arith.constant 0 : i32
    return %c0_i32, %c0_i32_0, %c0_i32_1 : i32, i32, i32
  }
  func.func @transform_14(%arg0: i32) -> (i32, i32, i32) {
    %c0_i32 = arith.constant 0 : i32
    %c0_i32_0 = arith.constant 0 : i32
    %c0_i32_1 = arith.constant 0 : i32
    %c0_i32_2 = arith.constant 0 : i32
    return %c0_i32, %c0_i32_0, %c0_i32_1 : i32, i32, i32
  }
  func.func @transform_15(%arg0: i32) -> (i32, i32) {
    %c0_i32 = arith.constant 0 : i32
    %c0_i32_0 = arith.constant 0 : i32
    %c0_i32_1 = arith.constant 0 : i32
    return %c0_i32, %c0_i32_0 : i32, i32
  }
  func.func @transform_16(%arg0: i32) -> (i32, i32) {
    %c0_i32 = arith.constant 0 : i32
    %c0_i32_0 = arith.constant 0 : i32
    %c0_i32_1 = arith.constant 0 : i32
    return %c0_i32, %c0_i32_0 : i32, i32
  }
  func.func @transform_17(%arg0: i32) -> (i32, i32) {
    %c0_i32 = arith.constant 0 : i32
    %c0_i32_0 = arith.constant 0 : i32
    return %c0_i32, %arg0 : i32, i32
  }
}

</mosaic_0001>

<llo_original>
// kernel: tpu_custom_call.1
$region0: #{tpu_custom_call.1}
  #allocation0 [shape = 'u32[]', space=smem, size = 0x4, offset = 0x4, fixed_abs, tag = 'smem constant byte address 0x4 - core index']
  #allocation1 [shape = 'u32[144,128]{1,0:T(1,128)}', space=vmem, size = 0x12000, scoped, tag = 'internal scratch']
  %s0 = inlined_call_operand.vmem [shape: f32[16,128], index: 0, kind: input, shape index: {}]
  %s1 = inlined_call_operand.vmem [shape: f32[32,16], index: 1, kind: input, shape index: {}]
  %s2 = inlined_call_operand.vmem [shape: f32[32,1], index: 2, kind: input, shape index: {}]
  %s3 = inlined_call_operand.vmem [shape: f32[32,1], index: 3, kind: input, shape index: {}]
  %s4 = inlined_call_operand.vmem [shape: f32[32,1], index: 4, kind: input, shape index: {}]
  %s5 = inlined_call_operand.vmem [shape: f32[2,32,32], index: 5, kind: input, shape index: {}]
  %s6 = inlined_call_operand.vmem [shape: f32[2,32,1], index: 6, kind: input, shape index: {}]
  %s7 = inlined_call_operand.vmem [shape: f32[2,32,1], index: 7, kind: input, shape index: {}]
  %s8 = inlined_call_operand.vmem [shape: f32[2,32,1], index: 8, kind: input, shape index: {}]
  %s9 = inlined_call_operand.vmem [shape: f32[2,128,32], index: 9, kind: input, shape index: {}]
  %s10 = inlined_call_operand.vmem [shape: f32[2,128,1], index: 10, kind: input, shape index: {}]
  %s11 = inlined_call_operand.vmem [shape: f32[2,32,128], index: 11, kind: input, shape index: {}]
  %s12 = inlined_call_operand.vmem [shape: f32[2,32,1], index: 12, kind: input, shape index: {}]
  %s13 = inlined_call_operand.vmem [shape: f32[2,32,1], index: 13, kind: input, shape index: {}]
  %s14 = inlined_call_operand.vmem [shape: f32[2,32,1], index: 14, kind: input, shape index: {}]
  %s15 = inlined_call_operand.vmem [shape: f32[8,32], index: 15, kind: input, shape index: {}]
  %s16 = inlined_call_operand.vmem [shape: f32[8,1], index: 16, kind: input, shape index: {}]
  %s17 = inlined_call_operand.hbm [shape: f32[8,128], index: 17, kind: output, shape index: {}]
  %s18 = sld [smem:[#allocation0]]
  $region78: #{tpu_custom_call.1} parent=0
    _
  %s20 = ssub.s32 1, %s18
  %s21 = scalar_select 0, %s20, %s18
  $region1: #{tpu_custom_call.1} parent=0
    #allocation2 [shape = 'u8[4096]{0}', space=vmem, size = 0x1000, scoped, tag = 'output window, operand 0, single buffered']
    #allocation3 [shape = 's32[1]{0}', space=sflag, size = 0x4, scoped, tag = 'scoped memory for tpu_custom_call.1']
    %22 = vsyncpa [#allocation3], 0
    // Predicated region
    $region2: #{tpu_custom_call.1} parent=1 // pred_check
      _
    $region3: #{tpu_custom_call.1} parent=1 // pred_check_branch
      %24 = sbr.rel (0) target = $region5
    $region4: #{tpu_custom_call.1} parent=1 // pred_region
      _
    $region5: #{tpu_custom_call.1} parent=1 // pred_fallthru
      _
    // Predicated region
    $region6: #{tpu_custom_call.1} parent=1 // pred_check
      _
    $region7: #{tpu_custom_call.1} parent=1 // pred_check_branch
      %26 = sbr.rel (0) target = $region9
    $region8: #{tpu_custom_call.1} parent=1 // pred_region
      _
    $region9: #{tpu_custom_call.1} parent=1 // pred_fallthru
      _
    // Predicated region
    $region10: #{tpu_custom_call.1} parent=1 // pred_check
      _
    $region11: #{tpu_custom_call.1} parent=1 // pred_check_branch
      %28 = sbr.rel (0) target = $region13
    $region12: #{tpu_custom_call.1} parent=1 // pred_region
      _
    $region13: #{tpu_custom_call.1} parent=1 // pred_fallthru
      _
    // Predicated region
    $region14: #{tpu_custom_call.1} parent=1 // pred_check
      _
    $region15: #{tpu_custom_call.1} parent=1 // pred_check_branch
      %30 = sbr.rel (0) target = $region17
    $region16: #{tpu_custom_call.1} parent=1 // pred_region
      _
    $region17: #{tpu_custom_call.1} parent=1 // pred_fallthru
      _
    // Predicated region
    $region18: #{tpu_custom_call.1} parent=1 // pred_check
      _
    $region19: #{tpu_custom_call.1} parent=1 // pred_check_branch
      %32 = sbr.rel (0) target = $region21
    $region20: #{tpu_custom_call.1} parent=1 // pred_region
      _
    $region21: #{tpu_custom_call.1} parent=1 // pred_fallthru
      _
    // Predicated region
    $region22: #{tpu_custom_call.1} parent=1 // pred_check
      _
    $region23: #{tpu_custom_call.1} parent=1 // pred_check_branch
      %34 = sbr.rel (0) target = $region25
    $region24: #{tpu_custom_call.1} parent=1 // pred_region
      _
    $region25: #{tpu_custom_call.1} parent=1 // pred_fallthru
      _
    // Predicated region
    $region26: #{tpu_custom_call.1} parent=1 // pred_check
      _
    $region27: #{tpu_custom_call.1} parent=1 // pred_check_branch
      %36 = sbr.rel (0) target = $region29
    $region28: #{tpu_custom_call.1} parent=1 // pred_region
      _
    $region29: #{tpu_custom_call.1} parent=1 // pred_fallthru
      _
    // Predicated region
    $region30: #{tpu_custom_call.1} parent=1 // pred_check
      _
    $region31: #{tpu_custom_call.1} parent=1 // pred_check_branch
      %38 = sbr.rel (0) target = $region33
    $region32: #{tpu_custom_call.1} parent=1 // pred_region
      _
    $region33: #{tpu_custom_call.1} parent=1 // pred_fallthru
      _
    // Predicated region
    $region34: #{tpu_custom_call.1} parent=1 // pred_check
      _
    $region35: #{tpu_custom_call.1} parent=1 // pred_check_branch
      %40 = sbr.rel (0) target = $region37
    $region36: #{tpu_custom_call.1} parent=1 // pred_region
      _
    $region37: #{tpu_custom_call.1} parent=1 // pred_fallthru
      _
    // Predicated region
    $region38: #{tpu_custom_call.1} parent=1 // pred_check
      _
    $region39: #{tpu_custom_call.1} parent=1 // pred_check_branch
      %42 = sbr.rel (0) target = $region41
    $region40: #{tpu_custom_call.1} parent=1 // pred_region
      _
    $region41: #{tpu_custom_call.1} parent=1 // pred_fallthru
      _
    // Predicated region
    $region42: #{tpu_custom_call.1} parent=1 // pred_check
      _
    $region43: #{tpu_custom_call.1} parent=1 // pred_check_branch
      %44 = sbr.rel (0) target = $region45
    $region44: #{tpu_custom_call.1} parent=1 // pred_region
      _
    $region45: #{tpu_custom_call.1} parent=1 // pred_fallthru
      _
    // Predicated region
    $region46: #{tpu_custom_call.1} parent=1 // pred_check
      _
    $region47: #{tpu_custom_call.1} parent=1 // pred_check_branch
      %46 = sbr.rel (0) target = $region49
    $region48: #{tpu_custom_call.1} parent=1 // pred_region
      _
    $region49: #{tpu_custom_call.1} parent=1 // pred_fallthru
      _
    // Predicated region
    $region50: #{tpu_custom_call.1} parent=1 // pred_check
      _
    $region51: #{tpu_custom_call.1} parent=1 // pred_check_branch
      %48 = sbr.rel (0) target = $region53
    $region52: #{tpu_custom_call.1} parent=1 // pred_region
      _
    $region53: #{tpu_custom_call.1} parent=1 // pred_fallthru
      _
    // Predicated region
    $region54: #{tpu_custom_call.1} parent=1 // pred_check
      _
    $region55: #{tpu_custom_call.1} parent=1 // pred_check_branch
      %50 = sbr.rel (0) target = $region57
    $region56: #{tpu_custom_call.1} parent=1 // pred_region
      _
    $region57: #{tpu_custom_call.1} parent=1 // pred_fallthru
      _
    // Predicated region
    $region58: #{tpu_custom_call.1} parent=1 // pred_check
      _
    $region59: #{tpu_custom_call.1} parent=1 // pred_check_branch
      %52 = sbr.rel (0) target = $region61
    $region60: #{tpu_custom_call.1} parent=1 // pred_region
      _
    $region61: #{tpu_custom_call.1} parent=1 // pred_fallthru
      _
    // Predicated region
    $region62: #{tpu_custom_call.1} parent=1 // pred_check
      _
    $region63: #{tpu_custom_call.1} parent=1 // pred_check_branch
      %54 = sbr.rel (0) target = $region65
    $region64: #{tpu_custom_call.1} parent=1 // pred_region
      _
    $region65: #{tpu_custom_call.1} parent=1 // pred_fallthru
      _
    // Predicated region
    $region66: #{tpu_custom_call.1} parent=1 // pred_check
      _
    $region67: #{tpu_custom_call.1} parent=1 // pred_check_branch
      %56 = sbr.rel (0) target = $region69
    $region68: #{tpu_custom_call.1} parent=1 // pred_region
      _
    $region69: #{tpu_custom_call.1} parent=1 // pred_fallthru
      _
    %v57 = vld [vmem:[%s1] sm:$0xff]
    %v58 = vld [vmem:[%s1 + $0x8] sm:$0xff]
    %v59 = vld [vmem:[%s1 + $0x10] sm:$0xff]
    %v60 = vld [vmem:[%s1 + $0x18] sm:$0xff]
    %v61 = vld [vmem:[%s0] sm:$0xff]
    %v62 = vld [vmem:[%s0 + $0x8] sm:$0xff]
    %v63 = vld [vmem:[%s2] sm:$0xff]
    %v64 = vld [vmem:[%s2 + $0x8] sm:$0xff]
    %v65 = vld [vmem:[%s2 + $0x10] sm:$0xff]
    %v66 = vld [vmem:[%s2 + $0x18] sm:$0xff]
    %68 = vset.pattern.permute.xlu0 0
    %69 = vperm.xlu0 %68, %v63
    %v70 = vpop.permute.xlu0 %69
    %73 = vset.pattern.permute.xlu0 0
    %74 = vperm.xlu0 %73, %v64
    %v75 = vpop.permute.xlu0 %74
    %78 = vset.pattern.permute.xlu0 0
    %79 = vperm.xlu0 %78, %v65
    %v80 = vpop.permute.xlu0 %79
    %83 = vset.pattern.permute.xlu0 0
    %84 = vperm.xlu0 %83, %v66
    %v85 = vpop.permute.xlu0 %84
    %vm87 = vcmask 130048
    %v89 = vsel %vm87, %v57, 0
    %v92 = vsel %vm87, %v58, 0
    %v95 = vsel %vm87, %v59, 0
    %v98 = vsel %vm87, %v60, 0
    %100 = vmatprep.subr.mxu0 0.0
    %101 = vmatpush1.msra.mxu0 %v61
    %102 = vmatprep.subr.mxu0 0.0
    %103 = vmatpush1.msra.mxu0 %v62
    %104 = vmatprep.subr.mxu0 0.0
    %105 = vmatpush1.msra.mxu0 0.0
    %106 = vmatprep.subr.mxu0 0.0
    %107 = vmatpush1.msra.mxu0 0.0
    %108 = vmatprep.subr.mxu0 0.0
    %109 = vmatpush1.msra.mxu0 0.0
    %110 = vmatprep.subr.mxu0 0.0
    %111 = vmatpush1.msra.mxu0 0.0
    %112 = vmatprep.subr.mxu0 0.0
    %113 = vmatpush1.msra.mxu0 0.0
    %114 = vmatprep.subr.mxu0 0.0
    %115 = vmatpush1.msra.mxu0 0.0
    %116 = vmatprep.subr.mxu0 0.0
    %117 = vmatpush1.msra.mxu0 0.0
    %118 = vmatprep.subr.mxu0 0.0
    %119 = vmatpush1.msra.mxu0 0.0
    %120 = vmatprep.subr.mxu0 0.0
    %121 = vmatpush1.msra.mxu0 0.0
    %122 = vmatprep.subr.mxu0 0.0
    %123 = vmatpush1.msra.mxu0 0.0
    %124 = vmatprep.subr.mxu0 0.0
    %125 = vmatpush1.msra.mxu0 0.0
    %126 = vmatprep.subr.mxu0 0.0
    %127 = vmatpush1.msra.mxu0 0.0
    %128 = vmatprep.subr.mxu0 0.0
    %129 = vmatpush1.msra.mxu0 0.0
    %130 = vmatprep.subr.mxu0 0.0
    %131 = vmatpush1.msra.mxu0 0.0
    %132 = vmatprep.subr.mxu0 0.0
    %133 = vmatpush1.msra.mxu0 0.0
    %134 = vmatprep.subr.mxu0 0.0
    %135 = vmatpush1.msra.mxu0 0.0
    %136 = vmatprep.subr.mxu0 0.0
    %137 = vmatpush1.msra.mxu0 0.0
    %138 = vmatprep.subr.mxu0 0.0
    %139 = vmatpush1.msra.mxu0 0.0
    %140 = vmatprep.subr.mxu0 0.0
    %141 = vmatpush1.msra.mxu0 0.0
    %142 = vmatprep.subr.mxu0 0.0
    %143 = vmatpush1.msra.mxu0 0.0
    %144 = vmatprep.subr.mxu0 0.0
    %145 = vmatpush1.msra.mxu0 0.0
    %146 = vmatprep.subr.mxu0 0.0
    %147 = vmatpush1.msra.mxu0 0.0
    %148 = vmatprep.subr.mxu0 0.0
    %149 = vmatpush1.msra.mxu0 0.0
    %150 = vmatprep.subr.mxu0 0.0
    %151 = vmatpush1.msra.mxu0 0.0
    %152 = vmatprep.subr.mxu0 0.0
    %153 = vmatpush1.msra.mxu0 0.0
    %154 = vmatprep.subr.mxu0 0.0
    %155 = vmatpush1.msra.mxu0 0.0
    %156 = vmatprep.subr.mxu0 0.0
    %157 = vmatpush1.msra.mxu0 0.0
    %158 = vmatprep.subr.mxu0 0.0
    %159 = vmatpush1.msra.mxu0 0.0
    %160 = vmatprep.subr.mxu0 0.0
    %161 = vmatpush1.msra.mxu0 0.0
    %162 = vmatprep.subr.mxu0 0.0
    %163 = vmatpush1.msra.mxu0 0.0
    %164 = vmatprep.mubr.f32.mxu0 0.0
    %165 = vmatmul.mubr.f32.gmra.mrb[0].mxu0 %v89
    %v166 = vpop.f32.mrb[0].mxu0
    %v167 = vadd.f32 %v70, %v166
    %v168 = vpop.f32.mrb[0].mxu0
    %169 = vmatprep.mubr.f32.mxu0 0.0
    %170 = vmatmul.mubr.f32.gmra.mrb[0].mxu0 %v92
    %v171 = vpop.f32.mrb[0].mxu0
    %v172 = vadd.f32 %v75, %v171
    %v173 = vpop.f32.mrb[0].mxu0
    %174 = vmatprep.mubr.f32.mxu0 0.0
    %175 = vmatmul.mubr.f32.gmra.mrb[0].mxu0 %v95
    %v176 = vpop.f32.mrb[0].mxu0
    %v177 = vadd.f32 %v80, %v176
    %v178 = vpop.f32.mrb[0].mxu0
    %179 = vmatprep.mubr.f32.mxu0 0.0
    %180 = vmatmul.mubr.f32.gmra.mrb[0].mxu0 %v98
    %v181 = vpop.f32.mrb[0].mxu0
    %v182 = vadd.f32 %v85, %v181
    %v183 = vpop.f32.mrb[0].mxu0
    %184 = vdwg.mxu0
    %v185 = vld [vmem:[%s3] sm:$0xff]
    %v186 = vld [vmem:[%s3 + $0x8] sm:$0xff]
    %v187 = vld [vmem:[%s3 + $0x10] sm:$0xff]
    %v188 = vld [vmem:[%s3 + $0x18] sm:$0xff]
    %v189 = vld [vmem:[%s4] sm:$0xff]
    %v190 = vld [vmem:[%s4 + $0x8] sm:$0xff]
    %v191 = vld [vmem:[%s4 + $0x10] sm:$0xff]
    %v192 = vld [vmem:[%s4 + $0x18] sm:$0xff]
    %v193 = vadd.f32 %v167, %v172
    %v194 = vadd.f32 %v193, %v177
    %v195 = vadd.f32 %v194, %v182
    %v196 = vrot.slane %v195, 4
    %v197 = vadd.f32 %v195, %v196
    %v198 = vrot.slane %v197, 2
    %v199 = vadd.f32 %v197, %v198
    %v200 = vrot.slane %v199, 1
    %v201 = vadd.f32 %v199, %v200
    %v202 = vrcp.pop 32.0
    %v203 = vmul.f32 %v201, %v202
    %v204 = vmul.f32 %v167, %v167
    %v205 = vmul.f32 %v172, %v172
    %v206 = vmul.f32 %v177, %v177
    %v207 = vmul.f32 %v182, %v182
    %v208 = vadd.f32 %v204, %v205
    %v209 = vadd.f32 %v208, %v206
    %v210 = vadd.f32 %v209, %v207
    %v211 = vrot.slane %v210, 4
    %v212 = vadd.f32 %v210, %v211
    %v213 = vrot.slane %v212, 2
    %v214 = vadd.f32 %v212, %v213
    %v215 = vrot.slane %v214, 1
    %v216 = vadd.f32 %v214, %v215
    %v217 = vmul.f32 %v216, %v202
    %v218 = vmul.f32 %v203, %v203
    %v219 = vsub.f32 %v217, %v218
    %v220 = vmax.f32 %v219, 0.0
    %v221 = vsub.f32 %v167, %v203
    %v222 = vsub.f32 %v172, %v203
    %v223 = vsub.f32 %v177, %v203
    %v224 = vsub.f32 %v182, %v203
    %v225 = vadd.f32 %v220, 1e-12
    %v226 = vrsqrt.pop %v225
    %v227 = vmul.f32 %v221, %v226
    %v228 = vmul.f32 %v222, %v226
    %v229 = vmul.f32 %v223, %v226
    %v230 = vmul.f32 %v224, %v226
    %232 = vset.pattern.permute.xlu0 0
    %233 = vperm.xlu0 %232, %v185
    %v234 = vpop.permute.xlu0 %233
    %237 = vset.pattern.permute.xlu0 0
    %238 = vperm.xlu0 %237, %v186
    %v239 = vpop.permute.xlu0 %238
    %242 = vset.pattern.permute.xlu0 0
    %243 = vperm.xlu0 %242, %v187
    %v244 = vpop.permute.xlu0 %243
    %247 = vset.pattern.permute.xlu0 0
    %248 = vperm.xlu0 %247, %v188
    %v249 = vpop.permute.xlu0 %248
    %v251 = vmul.f32 %v227, %v234
    %v252 = vmul.f32 %v228, %v239
    %v253 = vmul.f32 %v229, %v244
    %v254 = vmul.f32 %v230, %v249
    %256 = vset.pattern.permute.xlu0 0
    %257 = vperm.xlu0 %256, %v189
    %v258 = vpop.permute.xlu0 %257
    %261 = vset.pattern.permute.xlu0 0
    %262 = vperm.xlu0 %261, %v190
    %v263 = vpop.permute.xlu0 %262
    %266 = vset.pattern.permute.xlu0 0
    %267 = vperm.xlu0 %266, %v191
    %v268 = vpop.permute.xlu0 %267
    %271 = vset.pattern.permute.xlu0 0
    %272 = vperm.xlu0 %271, %v192
    %v273 = vpop.permute.xlu0 %272
    %v275 = vadd.f32 %v251, %v258
    %v276 = vadd.f32 %v252, %v263
    %v277 = vadd.f32 %v253, %v268
    %v278 = vadd.f32 %v254, %v273
    %v279 = vld [vmem:[%s5] sm:$0xff]
    %v280 = vld [vmem:[%s5 + $0x8] sm:$0xff]
    %v281 = vld [vmem:[%s5 + $0x10] sm:$0xff]
    %v282 = vld [vmem:[%s5 + $0x18] sm:$0xff]
    %v283 = vld [vmem:[%s6] sm:$0xff]
    %v284 = vld [vmem:[%s6 + $0x8] sm:$0xff]
    %v285 = vld [vmem:[%s6 + $0x10] sm:$0xff]
    %v286 = vld [vmem:[%s6 + $0x18] sm:$0xff]
    %288 = vset.pattern.permute.xlu0 0
    %289 = vperm.xlu0 %288, %v283
    %v290 = vpop.permute.xlu0 %289
    %293 = vset.pattern.permute.xlu0 0
    %294 = vperm.xlu0 %293, %v284
    %v295 = vpop.permute.xlu0 %294
    %298 = vset.pattern.permute.xlu0 0
    %299 = vperm.xlu0 %298, %v285
    %v300 = vpop.permute.xlu0 %299
    %303 = vset.pattern.permute.xlu0 0
    %304 = vperm.xlu0 %303, %v286
    %v305 = vpop.permute.xlu0 %304
    %vm307 = vcmask 261120
    %v309 = vsel %vm307, %v279, 0
    %v312 = vsel %vm307, %v280, 0
    %v315 = vsel %vm307, %v281, 0
    %v318 = vsel %vm307, %v282, 0
    %320 = vmatprep.subr.mxu0 0.0
    %321 = vmatpush1.msra.mxu0 %v275
    %322 = vmatprep.subr.mxu0 0.0
    %323 = vmatpush1.msra.mxu0 %v276
    %324 = vmatprep.subr.mxu0 0.0
    %325 = vmatpush1.msra.mxu0 %v277
    %326 = vmatprep.subr.mxu0 0.0
    %327 = vmatpush1.msra.mxu0 %v278
    %328 = vmatprep.subr.mxu0 0.0
    %329 = vmatpush1.msra.mxu0 0.0
    %330 = vmatprep.subr.mxu0 0.0
    %331 = vmatpush1.msra.mxu0 0.0
    %332 = vmatprep.subr.mxu0 0.0
    %333 = vmatpush1.msra.mxu0 0.0
    %334 = vmatprep.subr.mxu0 0.0
    %335 = vmatpush1.msra.mxu0 0.0
    %336 = vmatprep.subr.mxu0 0.0
    %337 = vmatpush1.msra.mxu0 0.0
    %338 = vmatprep.subr.mxu0 0.0
    %339 = vmatpush1.msra.mxu0 0.0
    %340 = vmatprep.subr.mxu0 0.0
    %341 = vmatpush1.msra.mxu0 0.0
    %342 = vmatprep.subr.mxu0 0.0
    %343 = vmatpush1.msra.mxu0 0.0
    %344 = vmatprep.subr.mxu0 0.0
    %345 = vmatpush1.msra.mxu0 0.0
    %346 = vmatprep.subr.mxu0 0.0
    %347 = vmatpush1.msra.mxu0 0.0
    %348 = vmatprep.subr.mxu0 0.0
    %349 = vmatpush1.msra.mxu0 0.0
    %350 = vmatprep.subr.mxu0 0.0
    %351 = vmatpush1.msra.mxu0 0.0
    %352 = vmatprep.subr.mxu0 0.0
    %353 = vmatpush1.msra.mxu0 0.0
    %354 = vmatprep.subr.mxu0 0.0
    %355 = vmatpush1.msra.mxu0 0.0
    %356 = vmatprep.subr.mxu0 0.0
    %357 = vmatpush1.msra.mxu0 0.0
    %358 = vmatprep.subr.mxu0 0.0
    %359 = vmatpush1.msra.mxu0 0.0
    %360 = vmatprep.subr.mxu0 0.0
    %361 = vmatpush1.msra.mxu0 0.0
    %362 = vmatprep.subr.mxu0 0.0
    %363 = vmatpush1.msra.mxu0 0.0
    %364 = vmatprep.subr.mxu0 0.0
    %365 = vmatpush1.msra.mxu0 0.0
    %366 = vmatprep.subr.mxu0 0.0
    %367 = vmatpush1.msra.mxu0 0.0
    %368 = vmatprep.subr.mxu0 0.0
    %369 = vmatpush1.msra.mxu0 0.0
    %370 = vmatprep.subr.mxu0 0.0
    %371 = vmatpush1.msra.mxu0 0.0
    %372 = vmatprep.subr.mxu0 0.0
    %373 = vmatpush1.msra.mxu0 0.0
    %374 = vmatprep.subr.mxu0 0.0
    %375 = vmatpush1.msra.mxu0 0.0
    %376 = vmatprep.subr.mxu0 0.0
    %377 = vmatpush1.msra.mxu0 0.0
    %378 = vmatprep.subr.mxu0 0.0
    %379 = vmatpush1.msra.mxu0 0.0
    %380 = vmatprep.subr.mxu0 0.0
    %381 = vmatpush1.msra.mxu0 0.0
    %382 = vmatprep.subr.mxu0 0.0
    %383 = vmatpush1.msra.mxu0 0.0
    %384 = vmatprep.mubr.f32.mxu0 0.0
    %385 = vmatmul.mubr.f32.gmra.mrb[0].mxu0 %v309
    %v386 = vpop.f32.mrb[0].mxu0
    %v387 = vadd.f32 %v290, %v386
    %v388 = vpop.f32.mrb[0].mxu0
    %389 = vmatprep.mubr.f32.mxu0 0.0
    %390 = vmatmul.mubr.f32.gmra.mrb[0].mxu0 %v312
    %v391 = vpop.f32.mrb[0].mxu0
    %v392 = vadd.f32 %v295, %v391
    %v393 = vpop.f32.mrb[0].mxu0
    %394 = vmatprep.mubr.f32.mxu0 0.0
    %395 = vmatmul.mubr.f32.gmra.mrb[0].mxu0 %v315
    %v396 = vpop.f32.mrb[0].mxu0
    %v397 = vadd.f32 %v300, %v396
    %v398 = vpop.f32.mrb[0].mxu0
    %399 = vmatprep.mubr.f32.mxu0 0.0
    %400 = vmatmul.mubr.f32.gmra.mrb[0].mxu0 %v318
    %v401 = vpop.f32.mrb[0].mxu0
    %v402 = vadd.f32 %v305, %v401
    %v403 = vpop.f32.mrb[0].mxu0
    %404 = vdwg.mxu0
    %v405 = vadd.f32 %v387, %v275
    %v406 = vadd.f32 %v392, %v276
    %v407 = vadd.f32 %v397, %v277
    %v408 = vadd.f32 %v402, %v278
    %v409 = vld [vmem:[%s7] sm:$0xff]
    %v410 = vld [vmem:[%s7 + $0x8] sm:$0xff]
    %v411 = vld [vmem:[%s7 + $0x10] sm:$0xff]
    %v412 = vld [vmem:[%s7 + $0x18] sm:$0xff]
    %v413 = vld [vmem:[%s8] sm:$0xff]
    %v414 = vld [vmem:[%s8 + $0x8] sm:$0xff]
    %v415 = vld [vmem:[%s8 + $0x10] sm:$0xff]
    %v416 = vld [vmem:[%s8 + $0x18] sm:$0xff]
    %v417 = vadd.f32 %v405, %v406
    %v418 = vadd.f32 %v417, %v407
    %v419 = vadd.f32 %v418, %v408
    %v420 = vrot.slane %v419, 4
    %v421 = vadd.f32 %v419, %v420
    %v422 = vrot.slane %v421, 2
    %v423 = vadd.f32 %v421, %v422
    %v424 = vrot.slane %v423, 1
    %v425 = vadd.f32 %v423, %v424
    %v426 = vmul.f32 %v425, %v202
    %v427 = vmul.f32 %v405, %v405
    %v428 = vmul.f32 %v406, %v406
    %v429 = vmul.f32 %v407, %v407
    %v430 = vmul.f32 %v408, %v408
    %v431 = vadd.f32 %v427, %v428
    %v432 = vadd.f32 %v431, %v429
    %v433 = vadd.f32 %v432, %v430
    %v434 = vrot.slane %v433, 4
    %v435 = vadd.f32 %v433, %v434
    %v436 = vrot.slane %v435, 2
    %v437 = vadd.f32 %v435, %v436
    %v438 = vrot.slane %v437, 1
    %v439 = vadd.f32 %v437, %v438
    %v440 = vmul.f32 %v439, %v202
    %v441 = vmul.f32 %v426, %v426
    %v442 = vsub.f32 %v440, %v441
    %v443 = vmax.f32 %v442, 0.0
    %v444 = vsub.f32 %v405, %v426
    %v445 = vsub.f32 %v406, %v426
    %v446 = vsub.f32 %v407, %v426
    %v447 = vsub.f32 %v408, %v426
    %v448 = vadd.f32 %v443, 1e-12
    %v449 = vrsqrt.pop %v448
    %v450 = vmul.f32 %v444, %v449
    %v451 = vmul.f32 %v445, %v449
    %v452 = vmul.f32 %v446, %v449
    %v453 = vmul.f32 %v447, %v449
    %455 = vset.pattern.permute.xlu0 0
    %456 = vperm.xlu0 %455, %v409
    %v457 = vpop.permute.xlu0 %456
    %460 = vset.pattern.permute.xlu0 0
    %461 = vperm.xlu0 %460, %v410
    %v462 = vpop.permute.xlu0 %461
    %465 = vset.pattern.permute.xlu0 0
    %466 = vperm.xlu0 %465, %v411
    %v467 = vpop.permute.xlu0 %466
    %470 = vset.pattern.permute.xlu0 0
    %471 = vperm.xlu0 %470, %v412
    %v472 = vpop.permute.xlu0 %471
    %v474 = vmul.f32 %v450, %v457
    %v475 = vmul.f32 %v451, %v462
    %v476 = vmul.f32 %v452, %v467
    %v477 = vmul.f32 %v453, %v472
    %479 = vset.pattern.permute.xlu0 0
    %480 = vperm.xlu0 %479, %v413
    %v481 = vpop.permute.xlu0 %480
    %484 = vset.pattern.permute.xlu0 0
    %485 = vperm.xlu0 %484, %v414
    %v486 = vpop.permute.xlu0 %485
    %489 = vset.pattern.permute.xlu0 0
    %490 = vperm.xlu0 %489, %v415
    %v491 = vpop.permute.xlu0 %490
    %494 = vset.pattern.permute.xlu0 0
    %495 = vperm.xlu0 %494, %v416
    %v496 = vpop.permute.xlu0 %495
    %v498 = vadd.f32 %v474, %v481
    %v499 = vadd.f32 %v475, %v486
    %v500 = vadd.f32 %v476, %v491
    %v501 = vadd.f32 %v477, %v496
    %v502 = vld [vmem:[%s9] sm:$0xff]
    %v503 = vld [vmem:[%s9 + $0x8] sm:$0xff]
    %v504 = vld [vmem:[%s9 + $0x10] sm:$0xff]
    %v505 = vld [vmem:[%s9 + $0x18] sm:$0xff]
    %v506 = vld [vmem:[%s9 + $0x20] sm:$0xff]
    %v507 = vld [vmem:[%s9 + $0x28] sm:$0xff]
    %v508 = vld [vmem:[%s9 + $0x30] sm:$0xff]
    %v509 = vld [vmem:[%s9 + $0x38] sm:$0xff]
    %v510 = vld [vmem:[%s9 + $0x40] sm:$0xff]
    %v511 = vld [vmem:[%s9 + $0x48] sm:$0xff]
    %v512 = vld [vmem:[%s9 + $0x50] sm:$0xff]
    %v513 = vld [vmem:[%s9 + $0x58] sm:$0xff]
    %v514 = vld [vmem:[%s9 + $0x60] sm:$0xff]
    %v515 = vld [vmem:[%s9 + $0x68] sm:$0xff]
    %v516 = vld [vmem:[%s9 + $0x70] sm:$0xff]
    %v517 = vld [vmem:[%s9 + $0x78] sm:$0xff]
    %v518 = vld [vmem:[%s10] sm:$0xff]
    %v519 = vld [vmem:[%s10 + $0x8] sm:$0xff]
    %v520 = vld [vmem:[%s10 + $0x10] sm:$0xff]
    %v521 = vld [vmem:[%s10 + $0x18] sm:$0xff]
    %v522 = vld [vmem:[%s10 + $0x20] sm:$0xff]
    %v523 = vld [vmem:[%s10 + $0x28] sm:$0xff]
    %v524 = vld [vmem:[%s10 + $0x30] sm:$0xff]
    %v525 = vld [vmem:[%s10 + $0x38] sm:$0xff]
    %v526 = vld [vmem:[%s10 + $0x40] sm:$0xff]
    %v527 = vld [vmem:[%s10 + $0x48] sm:$0xff]
    %v528 = vld [vmem:[%s10 + $0x50] sm:$0xff]
    %v529 = vld [vmem:[%s10 + $0x58] sm:$0xff]
    %v530 = vld [vmem:[%s10 + $0x60] sm:$0xff]
    %v531 = vld [vmem:[%s10 + $0x68] sm:$0xff]
    %v532 = vld [vmem:[%s10 + $0x70] sm:$0xff]
    %v533 = vld [vmem:[%s10 + $0x78] sm:$0xff]
    %535 = vset.pattern.permute.xlu0 0
    %536 = vperm.xlu0 %535, %v518
    %v537 = vpop.permute.xlu0 %536
    %540 = vset.pattern.permute.xlu0 0
    %541 = vperm.xlu0 %540, %v519
    %v542 = vpop.permute.xlu0 %541
    %545 = vset.pattern.permute.xlu0 0
    %546 = vperm.xlu0 %545, %v520
    %v547 = vpop.permute.xlu0 %546
    %550 = vset.pattern.permute.xlu0 0
    %551 = vperm.xlu0 %550, %v521
    %v552 = vpop.permute.xlu0 %551
    %555 = vset.pattern.permute.xlu0 0
    %556 = vperm.xlu0 %555, %v522
    %v557 = vpop.permute.xlu0 %556
    %560 = vset.pattern.permute.xlu0 0
    %561 = vperm.xlu0 %560, %v523
    %v562 = vpop.permute.xlu0 %561
    %565 = vset.pattern.permute.xlu0 0
    %566 = vperm.xlu0 %565, %v524
    %v567 = vpop.permute.xlu0 %566
    %570 = vset.pattern.permute.xlu0 0
    %571 = vperm.xlu0 %570, %v525
    %v572 = vpop.permute.xlu0 %571
    %575 = vset.pattern.permute.xlu0 0
    %576 = vperm.xlu0 %575, %v526
    %v577 = vpop.permute.xlu0 %576
    %580 = vset.pattern.permute.xlu0 0
    %581 = vperm.xlu0 %580, %v527
    %v582 = vpop.permute.xlu0 %581
    %585 = vset.pattern.permute.xlu0 0
    %586 = vperm.xlu0 %585, %v528
    %v587 = vpop.permute.xlu0 %586
    %590 = vset.pattern.permute.xlu0 0
    %591 = vperm.xlu0 %590, %v529
    %v592 = vpop.permute.xlu0 %591
    %595 = vset.pattern.permute.xlu0 0
    %596 = vperm.xlu0 %595, %v530
    %v597 = vpop.permute.xlu0 %596
    %600 = vset.pattern.permute.xlu0 0
    %601 = vperm.xlu0 %600, %v531
    %v602 = vpop.permute.xlu0 %601
    %605 = vset.pattern.permute.xlu0 0
    %606 = vperm.xlu0 %605, %v532
    %v607 = vpop.permute.xlu0 %606
    %610 = vset.pattern.permute.xlu0 0
    %611 = vperm.xlu0 %610, %v533
    %v612 = vpop.permute.xlu0 %611
    %v615 = vsel %vm307, %v502, 0
    %v618 = vsel %vm307, %v503, 0
    %v621 = vsel %vm307, %v504, 0
    %v624 = vsel %vm307, %v505, 0
    %v627 = vsel %vm307, %v506, 0
    %v630 = vsel %vm307, %v507, 0
    %v633 = vsel %vm307, %v508, 0
    %v636 = vsel %vm307, %v509, 0
    %v639 = vsel %vm307, %v510, 0
    %v642 = vsel %vm307, %v511, 0
    %v645 = vsel %vm307, %v512, 0
    %v648 = vsel %vm307, %v513, 0
    %v651 = vsel %vm307, %v514, 0
    %v654 = vsel %vm307, %v515, 0
    %v657 = vsel %vm307, %v516, 0
    %v660 = vsel %vm307, %v517, 0
    %662 = vmatprep.subr.mxu0 0.0
    %663 = vmatpush1.msra.mxu0 %v498
    %664 = vmatprep.subr.mxu0 0.0
    %665 = vmatpush1.msra.mxu0 %v499
    %666 = vmatprep.subr.mxu0 0.0
    %667 = vmatpush1.msra.mxu0 %v500
    %668 = vmatprep.subr.mxu0 0.0
    %669 = vmatpush1.msra.mxu0 %v501
    %670 = vmatprep.subr.mxu0 0.0
    %671 = vmatpush1.msra.mxu0 0.0
    %672 = vmatprep.subr.mxu0 0.0
    %673 = vmatpush1.msra.mxu0 0.0
    %674 = vmatprep.subr.mxu0 0.0
    %675 = vmatpush1.msra.mxu0 0.0
    %676 = vmatprep.subr.mxu0 0.0
    %677 = vmatpush1.msra.mxu0 0.0
    %678 = vmatprep.subr.mxu0 0.0
    %679 = vmatpush1.msra.mxu0 0.0
    %680 = vmatprep.subr.mxu0 0.0
    %681 = vmatpush1.msra.mxu0 0.0
    %682 = vmatprep.subr.mxu0 0.0
    %683 = vmatpush1.msra.mxu0 0.0
    %684 = vmatprep.subr.mxu0 0.0
    %685 = vmatpush1.msra.mxu0 0.0
    %686 = vmatprep.subr.mxu0 0.0
    %687 = vmatpush1.msra.mxu0 0.0
    %688 = vmatprep.subr.mxu0 0.0
    %689 = vmatpush1.msra.mxu0 0.0
    %690 = vmatprep.subr.mxu0 0.0
    %691 = vmatpush1.msra.mxu0 0.0
    %692 = vmatprep.subr.mxu0 0.0
    %693 = vmatpush1.msra.mxu0 0.0
    %694 = vmatprep.subr.mxu0 0.0
    %695 = vmatpush1.msra.mxu0 0.0
    %696 = vmatprep.subr.mxu0 0.0
    %697 = vmatpush1.msra.mxu0 0.0
    %698 = vmatprep.subr.mxu0 0.0
    %699 = vmatpush1.msra.mxu0 0.0
    %700 = vmatprep.subr.mxu0 0.0
    %701 = vmatpush1.msra.mxu0 0.0
    %702 = vmatprep.subr.mxu0 0.0
    %703 = vmatpush1.msra.mxu0 0.0
    %704 = vmatprep.subr.mxu0 0.0
    %705 = vmatpush1.msra.mxu0 0.0
    %706 = vmatprep.subr.mxu0 0.0
    %707 = vmatpush1.msra.mxu0 0.0
    %708 = vmatprep.subr.mxu0 0.0
    %709 = vmatpush1.msra.mxu0 0.0
    %710 = vmatprep.subr.mxu0 0.0
    %711 = vmatpush1.msra.mxu0 0.0
    %712 = vmatprep.subr.mxu0 0.0
    %713 = vmatpush1.msra.mxu0 0.0
    %714 = vmatprep.subr.mxu0 0.0
    %715 = vmatpush1.msra.mxu0 0.0
    %716 = vmatprep.subr.mxu0 0.0
    %717 = vmatpush1.msra.mxu0 0.0
    %718 = vmatprep.subr.mxu0 0.0
    %719 = vmatpush1.msra.mxu0 0.0
    %720 = vmatprep.subr.mxu0 0.0
    %721 = vmatpush1.msra.mxu0 0.0
    %722 = vmatprep.subr.mxu0 0.0
    %723 = vmatpush1.msra.mxu0 0.0
    %724 = vmatprep.subr.mxu0 0.0
    %725 = vmatpush1.msra.mxu0 0.0
    %726 = vmatprep.mubr.f32.mxu0 0.0
    %727 = vmatmul.mubr.f32.gmra.mrb[0].mxu0 %v615
    %v728 = vpop.f32.mrb[0].mxu0
    %v729 = vadd.f32 %v537, %v728
    %v730 = vpop.f32.mrb[0].mxu0
    %731 = vmatprep.mubr.f32.mxu0 0.0
    %732 = vmatmul.mubr.f32.gmra.mrb[0].mxu0 %v618
    %v733 = vpop.f32.mrb[0].mxu0
    %v734 = vadd.f32 %v542, %v733
    %v735 = vpop.f32.mrb[0].mxu0
    %736 = vmatprep.mubr.f32.mxu0 0.0
    %737 = vmatmul.mubr.f32.gmra.mrb[0].mxu0 %v621
    %v738 = vpop.f32.mrb[0].mxu0
    %v739 = vadd.f32 %v547, %v738
    %v740 = vpop.f32.mrb[0].mxu0
    %741 = vmatprep.mubr.f32.mxu0 0.0
    %742 = vmatmul.mubr.f32.gmra.mrb[0].mxu0 %v624
    %v743 = vpop.f32.mrb[0].mxu0
    %v744 = vadd.f32 %v552, %v743
    %v745 = vpop.f32.mrb[0].mxu0
    %746 = vmatprep.mubr.f32.mxu0 0.0
    %747 = vmatmul.mubr.f32.gmra.mrb[0].mxu0 %v627
    %v748 = vpop.f32.mrb[0].mxu0
    %v749 = vadd.f32 %v557, %v748
    %v750 = vpop.f32.mrb[0].mxu0
    %751 = vmatprep.mubr.f32.mxu0 0.0
    %752 = vmatmul.mubr.f32.gmra.mrb[0].mxu0 %v630
    %v753 = vpop.f32.mrb[0].mxu0
    %v754 = vadd.f32 %v562, %v753
    %v755 = vpop.f32.mrb[0].mxu0
    %756 = vmatprep.mubr.f32.mxu0 0.0
    %757 = vmatmul.mubr.f32.gmra.mrb[0].mxu0 %v633
    %v758 = vpop.f32.mrb[0].mxu0
    %v759 = vadd.f32 %v567, %v758
    %v760 = vpop.f32.mrb[0].mxu0
    %761 = vmatprep.mubr.f32.mxu0 0.0
    %762 = vmatmul.mubr.f32.gmra.mrb[0].mxu0 %v636
    %v763 = vpop.f32.mrb[0].mxu0
    %v764 = vadd.f32 %v572, %v763
    %v765 = vpop.f32.mrb[0].mxu0
    %766 = vmatprep.mubr.f32.mxu0 0.0
    %767 = vmatmul.mubr.f32.gmra.mrb[0].mxu0 %v639
    %v768 = vpop.f32.mrb[0].mxu0
    %v769 = vadd.f32 %v577, %v768
    %v770 = vpop.f32.mrb[0].mxu0
    %771 = vmatprep.mubr.f32.mxu0 0.0
    %772 = vmatmul.mubr.f32.gmra.mrb[0].mxu0 %v642
    %v773 = vpop.f32.mrb[0].mxu0
    %v774 = vadd.f32 %v582, %v773
    %v775 = vpop.f32.mrb[0].mxu0
    %776 = vmatprep.mubr.f32.mxu0 0.0
    %777 = vmatmul.mubr.f32.gmra.mrb[0].mxu0 %v645
    %v778 = vpop.f32.mrb[0].mxu0
    %v779 = vadd.f32 %v587, %v778
    %v780 = vpop.f32.mrb[0].mxu0
    %781 = vmatprep.mubr.f32.mxu0 0.0
    %782 = vmatmul.mubr.f32.gmra.mrb[0].mxu0 %v648
    %v783 = vpop.f32.mrb[0].mxu0
    %v784 = vadd.f32 %v592, %v783
    %v785 = vpop.f32.mrb[0].mxu0
    %786 = vmatprep.mubr.f32.mxu0 0.0
    %787 = vmatmul.mubr.f32.gmra.mrb[0].mxu0 %v651
    %v788 = vpop.f32.mrb[0].mxu0
    %v789 = vadd.f32 %v597, %v788
    %v790 = vpop.f32.mrb[0].mxu0
    %791 = vmatprep.mubr.f32.mxu0 0.0
    %792 = vmatmul.mubr.f32.gmra.mrb[0].mxu0 %v654
    %v793 = vpop.f32.mrb[0].mxu0
    %v794 = vadd.f32 %v602, %v793
    %v795 = vpop.f32.mrb[0].mxu0
    %796 = vmatprep.mubr.f32.mxu0 0.0
    %797 = vmatmul.mubr.f32.gmra.mrb[0].mxu0 %v657
    %v798 = vpop.f32.mrb[0].mxu0
    %v799 = vadd.f32 %v607, %v798
    %v800 = vpop.f32.mrb[0].mxu0
    %801 = vmatprep.mubr.f32.mxu0 0.0
    %802 = vmatmul.mubr.f32.gmra.mrb[0].mxu0 %v660
    %v803 = vpop.f32.mrb[0].mxu0
    %v804 = vadd.f32 %v612, %v803
    %v805 = vpop.f32.mrb[0].mxu0
    %806 = vdwg.mxu0
    %v807 = vmul.f32 %v729, 0.5
    %v808 = vmul.f32 %v734, 0.5
    %v809 = vmul.f32 %v739, 0.5
    %v810 = vmul.f32 %v744, 0.5
    %v811 = vmul.f32 %v749, 0.5
    %v812 = vmul.f32 %v754, 0.5
    %v813 = vmul.f32 %v759, 0.5
    %v814 = vmul.f32 %v764, 0.5
    %v815 = vmul.f32 %v769, 0.5
    %v816 = vmul.f32 %v774, 0.5
    %v817 = vmul.f32 %v779, 0.5
    %v818 = vmul.f32 %v784, 0.5
    %v819 = vmul.f32 %v789, 0.5
    %v820 = vmul.f32 %v794, 0.5
    %v821 = vmul.f32 %v799, 0.5
    %v822 = vmul.f32 %v804, 0.5
    %v823 = vmul.f32 %v729, 0.70710677
    %v824 = vmul.f32 %v734, 0.70710677
    %v825 = vmul.f32 %v739, 0.70710677
    %v826 = vmul.f32 %v744, 0.70710677
    %v827 = vmul.f32 %v749, 0.70710677
    %v828 = vmul.f32 %v754, 0.70710677
    %v829 = vmul.f32 %v759, 0.70710677
    %v830 = vmul.f32 %v764, 0.70710677
    %v831 = vmul.f32 %v769, 0.70710677
    %v832 = vmul.f32 %v774, 0.70710677
    %v833 = vmul.f32 %v779, 0.70710677
    %v834 = vmul.f32 %v784, 0.70710677
    %v835 = vmul.f32 %v789, 0.70710677
    %v836 = vmul.f32 %v794, 0.70710677
    %v837 = vmul.f32 %v799, 0.70710677
    %v838 = vmul.f32 %v804, 0.70710677
    %v839 = verf.f32.pop %v823
    %v840 = verf.f32.pop %v824
    %v841 = verf.f32.pop %v825
    %v842 = verf.f32.pop %v826
    %v843 = verf.f32.pop %v827
    %v844 = verf.f32.pop %v828
    %v845 = verf.f32.pop %v829
    %v846 = verf.f32.pop %v830
    %v847 = verf.f32.pop %v831
    %v848 = verf.f32.pop %v832
    %v849 = verf.f32.pop %v833
    %v850 = verf.f32.pop %v834
    %v851 = verf.f32.pop %v835
    %v852 = verf.f32.pop %v836
    %v853 = verf.f32.pop %v837
    %v854 = verf.f32.pop %v838
    %v855 = vadd.f32 %v839, 1.0
    %v856 = vadd.f32 %v840, 1.0
    %v857 = vadd.f32 %v841, 1.0
    %v858 = vadd.f32 %v842, 1.0
    %v859 = vadd.f32 %v843, 1.0
    %v860 = vadd.f32 %v844, 1.0
    %v861 = vadd.f32 %v845, 1.0
    %v862 = vadd.f32 %v846, 1.0
    %v863 = vadd.f32 %v847, 1.0
    %v864 = vadd.f32 %v848, 1.0
    %v865 = vadd.f32 %v849, 1.0
    %v866 = vadd.f32 %v850, 1.0
    %v867 = vadd.f32 %v851, 1.0
    %v868 = vadd.f32 %v852, 1.0
    %v869 = vadd.f32 %v853, 1.0
    %v870 = vadd.f32 %v854, 1.0
    %v871 = vmul.f32 %v807, %v855
    %v872 = vmul.f32 %v808, %v856
    %v873 = vmul.f32 %v809, %v857
    %v874 = vmul.f32 %v810, %v858
    %v875 = vmul.f32 %v811, %v859
    %v876 = vmul.f32 %v812, %v860
    %v877 = vmul.f32 %v813, %v861
    %v878 = vmul.f32 %v814, %v862
    %v879 = vmul.f32 %v815, %v863
    %v880 = vmul.f32 %v816, %v864
    %v881 = vmul.f32 %v817, %v865
    %v882 = vmul.f32 %v818, %v866
    %v883 = vmul.f32 %v819, %v867
    %v884 = vmul.f32 %v820, %v868
    %v885 = vmul.f32 %v821, %v869
    %v886 = vmul.f32 %v822, %v870
    %v887 = vld [vmem:[%s11] sm:$0xff]
    %v888 = vld [vmem:[%s11 + $0x8] sm:$0xff]
    %v889 = vld [vmem:[%s11 + $0x10] sm:$0xff]
    %v890 = vld [vmem:[%s11 + $0x18] sm:$0xff]
    %v891 = vld [vmem:[%s12] sm:$0xff]
    %v892 = vld [vmem:[%s12 + $0x8] sm:$0xff]
    %v893 = vld [vmem:[%s12 + $0x10] sm:$0xff]
    %v894 = vld [vmem:[%s12 + $0x18] sm:$0xff]
    %896 = vset.pattern.permute.xlu0 0
    %897 = vperm.xlu0 %896, %v891
    %v898 = vpop.permute.xlu0 %897
    %901 = vset.pattern.permute.xlu0 0
    %902 = vperm.xlu0 %901, %v892
    %v903 = vpop.permute.xlu0 %902
    %906 = vset.pattern.permute.xlu0 0
    %907 = vperm.xlu0 %906, %v893
    %v908 = vpop.permute.xlu0 %907
    %911 = vset.pattern.permute.xlu0 0
    %912 = vperm.xlu0 %911, %v894
    %v913 = vpop.permute.xlu0 %912
    %915 = vmatprep.subr.mxu0 0.0
    %916 = vmatpush1.msra.mxu0 %v871
    %917 = vmatprep.subr.mxu0 0.0
    %918 = vmatpush1.msra.mxu0 %v872
    %919 = vmatprep.subr.mxu0 0.0
    %920 = vmatpush1.msra.mxu0 %v873
    %921 = vmatprep.subr.mxu0 0.0
    %922 = vmatpush1.msra.mxu0 %v874
    %923 = vmatprep.subr.mxu0 0.0
    %924 = vmatpush1.msra.mxu0 %v875
    %925 = vmatprep.subr.mxu0 0.0
    %926 = vmatpush1.msra.mxu0 %v876
    %927 = vmatprep.subr.mxu0 0.0
    %928 = vmatpush1.msra.mxu0 %v877
    %929 = vmatprep.subr.mxu0 0.0
    %930 = vmatpush1.msra.mxu0 %v878
    %931 = vmatprep.subr.mxu0 0.0
    %932 = vmatpush1.msra.mxu0 %v879
    %933 = vmatprep.subr.mxu0 0.0
    %934 = vmatpush1.msra.mxu0 %v880
    %935 = vmatprep.subr.mxu0 0.0
    %936 = vmatpush1.msra.mxu0 %v881
    %937 = vmatprep.subr.mxu0 0.0
    %938 = vmatpush1.msra.mxu0 %v882
    %939 = vmatprep.subr.mxu0 0.0
    %940 = vmatpush1.msra.mxu0 %v883
    %941 = vmatprep.subr.mxu0 0.0
    %942 = vmatpush1.msra.mxu0 %v884
    %943 = vmatprep.subr.mxu0 0.0
    %944 = vmatpush1.msra.mxu0 %v885
    %945 = vmatprep.subr.mxu0 0.0
    %946 = vmatpush1.msra.mxu0 %v886
    %947 = vmatprep.subr.mxu0 0.0
    %948 = vmatpush1.msra.mxu0 0.0
    %949 = vmatprep.subr.mxu0 0.0
    %950 = vmatpush1.msra.mxu0 0.0
    %951 = vmatprep.subr.mxu0 0.0
    %952 = vmatpush1.msra.mxu0 0.0
    %953 = vmatprep.subr.mxu0 0.0
    %954 = vmatpush1.msra.mxu0 0.0
    %955 = vmatprep.subr.mxu0 0.0
    %956 = vmatpush1.msra.mxu0 0.0
    %957 = vmatprep.subr.mxu0 0.0
    %958 = vmatpush1.msra.mxu0 0.0
    %959 = vmatprep.subr.mxu0 0.0
    %960 = vmatpush1.msra.mxu0 0.0
    %961 = vmatprep.subr.mxu0 0.0
    %962 = vmatpush1.msra.mxu0 0.0
    %963 = vmatprep.subr.mxu0 0.0
    %964 = vmatpush1.msra.mxu0 0.0
    %965 = vmatprep.subr.mxu0 0.0
    %966 = vmatpush1.msra.mxu0 0.0
    %967 = vmatprep.subr.mxu0 0.0
    %968 = vmatpush1.msra.mxu0 0.0
    %969 = vmatprep.subr.mxu0 0.0
    %970 = vmatpush1.msra.mxu0 0.0
    %971 = vmatprep.subr.mxu0 0.0
    %972 = vmatpush1.msra.mxu0 0.0
    %973 = vmatprep.subr.mxu0 0.0
    %974 = vmatpush1.msra.mxu0 0.0
    %975 = vmatprep.subr.mxu0 0.0
    %976 = vmatpush1.msra.mxu0 0.0
    %977 = vmatprep.subr.mxu0 0.0
    %978 = vmatpush1.msra.mxu0 0.0
    %979 = vmatprep.mubr.f32.mxu0 0.0
    %980 = vmatmul.mubr.f32.gmra.mrb[0].mxu0 %v887
    %v981 = vpop.f32.mrb[0].mxu0
    %v982 = vadd.f32 %v898, %v981
    %v983 = vpop.f32.mrb[0].mxu0
    %984 = vmatprep.mubr.f32.mxu0 0.0
    %985 = vmatmul.mubr.f32.gmra.mrb[0].mxu0 %v888
    %v986 = vpop.f32.mrb[0].mxu0
    %v987 = vadd.f32 %v903, %v986
    %v988 = vpop.f32.mrb[0].mxu0
    %989 = vmatprep.mubr.f32.mxu0 0.0
    %990 = vmatmul.mubr.f32.gmra.mrb[0].mxu0 %v889
    %v991 = vpop.f32.mrb[0].mxu0
    %v992 = vadd.f32 %v908, %v991
    %v993 = vpop.f32.mrb[0].mxu0
    %994 = vmatprep.mubr.f32.mxu0 0.0
    %995 = vmatmul.mubr.f32.gmra.mrb[0].mxu0 %v890
    %v996 = vpop.f32.mrb[0].mxu0
    %v997 = vadd.f32 %v913, %v996
    %v998 = vpop.f32.mrb[0].mxu0
    %999 = vdwg.mxu0
    %v1000 = vadd.f32 %v982, %v498
    %v1001 = vadd.f32 %v987, %v499
    %v1002 = vadd.f32 %v992, %v500
    %v1003 = vadd.f32 %v997, %v501
    %v1004 = vld [vmem:[%s13] sm:$0xff]
    %v1005 = vld [vmem:[%s13 + $0x8] sm:$0xff]
    %v1006 = vld [vmem:[%s13 + $0x10] sm:$0xff]
    %v1007 = vld [vmem:[%s13 + $0x18] sm:$0xff]
    %v1008 = vld [vmem:[%s14] sm:$0xff]
    %v1009 = vld [vmem:[%s14 + $0x8] sm:$0xff]
    %v1010 = vld [vmem:[%s14 + $0x10] sm:$0xff]
    %v1011 = vld [vmem:[%s14 + $0x18] sm:$0xff]
    %v1012 = vadd.f32 %v1000, %v1001
    %v1013 = vadd.f32 %v1012, %v1002
    %v1014 = vadd.f32 %v1013, %v1003
    %v1015 = vrot.slane %v1014, 4
    %v1016 = vadd.f32 %v1014, %v1015
    %v1017 = vrot.slane %v1016, 2
    %v1018 = vadd.f32 %v1016, %v1017
    %v1019 = vrot.slane %v1018, 1
    %v1020 = vadd.f32 %v1018, %v1019
    %v1021 = vmul.f32 %v1020, %v202
    %v1022 = vmul.f32 %v1000, %v1000
    %v1023 = vmul.f32 %v1001, %v1001
    %v1024 = vmul.f32 %v1002, %v1002
    %v1025 = vmul.f32 %v1003, %v1003
    %v1026 = vadd.f32 %v1022, %v1023
    %v1027 = vadd.f32 %v1026, %v1024
    %v1028 = vadd.f32 %v1027, %v1025
    %v1029 = vrot.slane %v1028, 4
    %v1030 = vadd.f32 %v1028, %v1029
    %v1031 = vrot.slane %v1030, 2
    %v1032 = vadd.f32 %v1030, %v1031
    %v1033 = vrot.slane %v1032, 1
    %v1034 = vadd.f32 %v1032, %v1033
    %v1035 = vmul.f32 %v1034, %v202
    %v1036 = vmul.f32 %v1021, %v1021
    %v1037 = vsub.f32 %v1035, %v1036
    %v1038 = vmax.f32 %v1037, 0.0
    %v1039 = vsub.f32 %v1000, %v1021
    %v1040 = vsub.f32 %v1001, %v1021
    %v1041 = vsub.f32 %v1002, %v1021
    %v1042 = vsub.f32 %v1003, %v1021
    %v1043 = vadd.f32 %v1038, 1e-12
    %v1044 = vrsqrt.pop %v1043
    %v1045 = vmul.f32 %v1039, %v1044
    %v1046 = vmul.f32 %v1040, %v1044
    %v1047 = vmul.f32 %v1041, %v1044
    %v1048 = vmul.f32 %v1042, %v1044
    %1050 = vset.pattern.permute.xlu0 0
    %1051 = vperm.xlu0 %1050, %v1004
    %v1052 = vpop.permute.xlu0 %1051
    %1055 = vset.pattern.permute.xlu0 0
    %1056 = vperm.xlu0 %1055, %v1005
    %v1057 = vpop.permute.xlu0 %1056
    %1060 = vset.pattern.permute.xlu0 0
    %1061 = vperm.xlu0 %1060, %v1006
    %v1062 = vpop.permute.xlu0 %1061
    %1065 = vset.pattern.permute.xlu0 0
    %1066 = vperm.xlu0 %1065, %v1007
    %v1067 = vpop.permute.xlu0 %1066
    %v1069 = vmul.f32 %v1045, %v1052
    %v1070 = vmul.f32 %v1046, %v1057
    %v1071 = vmul.f32 %v1047, %v1062
    %v1072 = vmul.f32 %v1048, %v1067
    %1074 = vset.pattern.permute.xlu0 0
    %1075 = vperm.xlu0 %1074, %v1008
    %v1076 = vpop.permute.xlu0 %1075
    %1079 = vset.pattern.permute.xlu0 0
    %1080 = vperm.xlu0 %1079, %v1009
    %v1081 = vpop.permute.xlu0 %1080
    %1084 = vset.pattern.permute.xlu0 0
    %1085 = vperm.xlu0 %1084, %v1010
    %v1086 = vpop.permute.xlu0 %1085
    %1089 = vset.pattern.permute.xlu0 0
    %1090 = vperm.xlu0 %1089, %v1011
    %v1091 = vpop.permute.xlu0 %1090
    %v1093 = vadd.f32 %v1069, %v1076
    %v1094 = vadd.f32 %v1070, %v1081
    %v1095 = vadd.f32 %v1071, %v1086
    %v1096 = vadd.f32 %v1072, %v1091
    %s1097 = scalar_lea.vmem %s5, 32
    %v1098 = vld [vmem:[%s1097] sm:$0xff]
    %v1099 = vld [vmem:[%s1097 + $0x8] sm:$0xff]
    %v1100 = vld [vmem:[%s1097 + $0x10] sm:$0xff]
    %v1101 = vld [vmem:[%s1097 + $0x18] sm:$0xff]
    %s1102 = scalar_lea.vmem %s6, 32
    %v1103 = vld [vmem:[%s1102] sm:$0xff]
    %v1104 = vld [vmem:[%s1102 + $0x8] sm:$0xff]
    %v1105 = vld [vmem:[%s1102 + $0x10] sm:$0xff]
    %v1106 = vld [vmem:[%s1102 + $0x18] sm:$0xff]
    %1108 = vset.pattern.permute.xlu0 0
    %1109 = vperm.xlu0 %1108, %v1103
    %v1110 = vpop.permute.xlu0 %1109
    %1113 = vset.pattern.permute.xlu0 0
    %1114 = vperm.xlu0 %1113, %v1104
    %v1115 = vpop.permute.xlu0 %1114
    %1118 = vset.pattern.permute.xlu0 0
    %1119 = vperm.xlu0 %1118, %v1105
    %v1120 = vpop.permute.xlu0 %1119
    %1123 = vset.pattern.permute.xlu0 0
    %1124 = vperm.xlu0 %1123, %v1106
    %v1125 = vpop.permute.xlu0 %1124
    %v1128 = vsel %vm307, %v1098, 0
    %v1131 = vsel %vm307, %v1099, 0
    %v1134 = vsel %vm307, %v1100, 0
    %v1137 = vsel %vm307, %v1101, 0
    %1139 = vmatprep.subr.mxu0 0.0
    %1140 = vmatpush1.msra.mxu0 %v1093
    %1141 = vmatprep.subr.mxu0 0.0
    %1142 = vmatpush1.msra.mxu0 %v1094
    %1143 = vmatprep.subr.mxu0 0.0
    %1144 = vmatpush1.msra.mxu0 %v1095
    %1145 = vmatprep.subr.mxu0 0.0
    %1146 = vmatpush1.msra.mxu0 %v1096
    %1147 = vmatprep.subr.mxu0 0.0
    %1148 = vmatpush1.msra.mxu0 0.0
    %1149 = vmatprep.subr.mxu0 0.0
    %1150 = vmatpush1.msra.mxu0 0.0
    %1151 = vmatprep.subr.mxu0 0.0
    %1152 = vmatpush1.msra.mxu0 0.0
    %1153 = vmatprep.subr.mxu0 0.0
    %1154 = vmatpush1.msra.mxu0 0.0
    %1155 = vmatprep.subr.mxu0 0.0
    %1156 = vmatpush1.msra.mxu0 0.0
    %1157 = vmatprep.subr.mxu0 0.0
    %1158 = vmatpush1.msra.mxu0 0.0
    %1159 = vmatprep.subr.mxu0 0.0
    %1160 = vmatpush1.msra.mxu0 0.0
    %1161 = vmatprep.subr.mxu0 0.0
    %1162 = vmatpush1.msra.mxu0 0.0
    %1163 = vmatprep.subr.mxu0 0.0
    %1164 = vmatpush1.msra.mxu0 0.0
    %1165 = vmatprep.subr.mxu0 0.0
    %1166 = vmatpush1.msra.mxu0 0.0
    %1167 = vmatprep.subr.mxu0 0.0
    %1168 = vmatpush1.msra.mxu0 0.0
    %1169 = vmatprep.subr.mxu0 0.0
    %1170 = vmatpush1.msra.mxu0 0.0
    %1171 = vmatprep.subr.mxu0 0.0
    %1172 = vmatpush1.msra.mxu0 0.0
    %1173 = vmatprep.subr.mxu0 0.0
    %1174 = vmatpush1.msra.mxu0 0.0
    %1175 = vmatprep.subr.mxu0 0.0
    %1176 = vmatpush1.msra.mxu0 0.0
    %1177 = vmatprep.subr.mxu0 0.0
    %1178 = vmatpush1.msra.mxu0 0.0
    %1179 = vmatprep.subr.mxu0 0.0
    %1180 = vmatpush1.msra.mxu0 0.0
    %1181 = vmatprep.subr.mxu0 0.0
    %1182 = vmatpush1.msra.mxu0 0.0
    %1183 = vmatprep.subr.mxu0 0.0
    %1184 = vmatpush1.msra.mxu0 0.0
    %1185 = vmatprep.subr.mxu0 0.0
    %1186 = vmatpush1.msra.mxu0 0.0
    %1187 = vmatprep.subr.mxu0 0.0
    %1188 = vmatpush1.msra.mxu0 0.0
    %1189 = vmatprep.subr.mxu0 0.0
    %1190 = vmatpush1.msra.mxu0 0.0
    %1191 = vmatprep.subr.mxu0 0.0
    %1192 = vmatpush1.msra.mxu0 0.0
    %1193 = vmatprep.subr.mxu0 0.0
    %1194 = vmatpush1.msra.mxu0 0.0
    %1195 = vmatprep.subr.mxu0 0.0
    %1196 = vmatpush1.msra.mxu0 0.0
    %1197 = vmatprep.subr.mxu0 0.0
    %1198 = vmatpush1.msra.mxu0 0.0
    %1199 = vmatprep.subr.mxu0 0.0
    %1200 = vmatpush1.msra.mxu0 0.0
    %1201 = vmatprep.subr.mxu0 0.0
    %1202 = vmatpush1.msra.mxu0 0.0
    %1203 = vmatprep.mubr.f32.mxu0 0.0
    %1204 = vmatmul.mubr.f32.gmra.mrb[0].mxu0 %v1128
    %v1205 = vpop.f32.mrb[0].mxu0
    %v1206 = vadd.f32 %v1110, %v1205
    %v1207 = vpop.f32.mrb[0].mxu0
    %1208 = vmatprep.mubr.f32.mxu0 0.0
    %1209 = vmatmul.mubr.f32.gmra.mrb[0].mxu0 %v1131
    %v1210 = vpop.f32.mrb[0].mxu0
    %v1211 = vadd.f32 %v1115, %v1210
    %v1212 = vpop.f32.mrb[0].mxu0
    %1213 = vmatprep.mubr.f32.mxu0 0.0
    %1214 = vmatmul.mubr.f32.gmra.mrb[0].mxu0 %v1134
    %v1215 = vpop.f32.mrb[0].mxu0
    %v1216 = vadd.f32 %v1120, %v1215
    %v1217 = vpop.f32.mrb[0].mxu0
    %1218 = vmatprep.mubr.f32.mxu0 0.0
    %1219 = vmatmul.mubr.f32.gmra.mrb[0].mxu0 %v1137
    %v1220 = vpop.f32.mrb[0].mxu0
    %v1221 = vadd.f32 %v1125, %v1220
    %v1222 = vpop.f32.mrb[0].mxu0
    %1223 = vdwg.mxu0
    %v1224 = vadd.f32 %v1206, %v1093
    %v1225 = vadd.f32 %v1211, %v1094
    %v1226 = vadd.f32 %v1216, %v1095
    %v1227 = vadd.f32 %v1221, %v1096
    %s1228 = scalar_lea.vmem %s7, 32
    %v1229 = vld [vmem:[%s1228] sm:$0xff]
    %v1230 = vld [vmem:[%s1228 + $0x8] sm:$0xff]
    %v1231 = vld [vmem:[%s1228 + $0x10] sm:$0xff]
    %v1232 = vld [vmem:[%s1228 + $0x18] sm:$0xff]
    %s1233 = scalar_lea.vmem %s8, 32
    %v1234 = vld [vmem:[%s1233] sm:$0xff]
    %v1235 = vld [vmem:[%s1233 + $0x8] sm:$0xff]
    %v1236 = vld [vmem:[%s1233 + $0x10] sm:$0xff]
    %v1237 = vld [vmem:[%s1233 + $0x18] sm:$0xff]
    %v1238 = vadd.f32 %v1224, %v1225
    %v1239 = vadd.f32 %v1238, %v1226
    %v1240 = vadd.f32 %v1239, %v1227
    %v1241 = vrot.slane %v1240, 4
    %v1242 = vadd.f32 %v1240, %v1241
    %v1243 = vrot.slane %v1242, 2
    %v1244 = vadd.f32 %v1242, %v1243
    %v1245 = vrot.slane %v1244, 1
    %v1246 = vadd.f32 %v1244, %v1245
    %v1247 = vmul.f32 %v1246, %v202
    %v1248 = vmul.f32 %v1224, %v1224
    %v1249 = vmul.f32 %v1225, %v1225
    %v1250 = vmul.f32 %v1226, %v1226
    %v1251 = vmul.f32 %v1227, %v1227
    %v1252 = vadd.f32 %v1248, %v1249
    %v1253 = vadd.f32 %v1252, %v1250
    %v1254 = vadd.f32 %v1253, %v1251
    %v1255 = vrot.slane %v1254, 4
    %v1256 = vadd.f32 %v1254, %v1255
    %v1257 = vrot.slane %v1256, 2
    %v1258 = vadd.f32 %v1256, %v1257
    %v1259 = vrot.slane %v1258, 1
    %v1260 = vadd.f32 %v1258, %v1259
    %v1261 = vmul.f32 %v1260, %v202
    %v1262 = vmul.f32 %v1247, %v1247
    %v1263 = vsub.f32 %v1261, %v1262
    %v1264 = vmax.f32 %v1263, 0.0
    %v1265 = vsub.f32 %v1224, %v1247
    %v1266 = vsub.f32 %v1225, %v1247
    %v1267 = vsub.f32 %v1226, %v1247
    %v1268 = vsub.f32 %v1227, %v1247
    %v1269 = vadd.f32 %v1264, 1e-12
    %v1270 = vrsqrt.pop %v1269
    %v1271 = vmul.f32 %v1265, %v1270
    %v1272 = vmul.f32 %v1266, %v1270
    %v1273 = vmul.f32 %v1267, %v1270
    %v1274 = vmul.f32 %v1268, %v1270
    %1276 = vset.pattern.permute.xlu0 0
    %1277 = vperm.xlu0 %1276, %v1229
    %v1278 = vpop.permute.xlu0 %1277
    %1281 = vset.pattern.permute.xlu0 0
    %1282 = vperm.xlu0 %1281, %v1230
    %v1283 = vpop.permute.xlu0 %1282
    %1286 = vset.pattern.permute.xlu0 0
    %1287 = vperm.xlu0 %1286, %v1231
    %v1288 = vpop.permute.xlu0 %1287
    %1291 = vset.pattern.permute.xlu0 0
    %1292 = vperm.xlu0 %1291, %v1232
    %v1293 = vpop.permute.xlu0 %1292
    %v1295 = vmul.f32 %v1271, %v1278
    %v1296 = vmul.f32 %v1272, %v1283
    %v1297 = vmul.f32 %v1273, %v1288
    %v1298 = vmul.f32 %v1274, %v1293
    %1300 = vset.pattern.permute.xlu0 0
    %1301 = vperm.xlu0 %1300, %v1234
    %v1302 = vpop.permute.xlu0 %1301
    %1305 = vset.pattern.permute.xlu0 0
    %1306 = vperm.xlu0 %1305, %v1235
    %v1307 = vpop.permute.xlu0 %1306
    %1310 = vset.pattern.permute.xlu0 0
    %1311 = vperm.xlu0 %1310, %v1236
    %v1312 = vpop.permute.xlu0 %1311
    %1315 = vset.pattern.permute.xlu0 0
    %1316 = vperm.xlu0 %1315, %v1237
    %v1317 = vpop.permute.xlu0 %1316
    %v1319 = vadd.f32 %v1295, %v1302
    %v1320 = vadd.f32 %v1296, %v1307
    %v1321 = vadd.f32 %v1297, %v1312
    %v1322 = vadd.f32 %v1298, %v1317
    %s1323 = scalar_lea.vmem %s9, 128
    %v1324 = vld [vmem:[%s1323] sm:$0xff]
    %v1325 = vld [vmem:[%s1323 + $0x8] sm:$0xff]
    %v1326 = vld [vmem:[%s1323 + $0x10] sm:$0xff]
    %v1327 = vld [vmem:[%s1323 + $0x18] sm:$0xff]
    %v1328 = vld [vmem:[%s1323 + $0x20] sm:$0xff]
    %v1329 = vld [vmem:[%s1323 + $0x28] sm:$0xff]
    %v1330 = vld [vmem:[%s1323 + $0x30] sm:$0xff]
    %v1331 = vld [vmem:[%s1323 + $0x38] sm:$0xff]
    %v1332 = vld [vmem:[%s1323 + $0x40] sm:$0xff]
    %v1333 = vld [vmem:[%s1323 + $0x48] sm:$0xff]
    %v1334 = vld [vmem:[%s1323 + $0x50] sm:$0xff]
    %v1335 = vld [vmem:[%s1323 + $0x58] sm:$0xff]
    %v1336 = vld [vmem:[%s1323 + $0x60] sm:$0xff]
    %v1337 = vld [vmem:[%s1323 + $0x68] sm:$0xff]
    %v1338 = vld [vmem:[%s1323 + $0x70] sm:$0xff]
    %v1339 = vld [vmem:[%s1323 + $0x78] sm:$0xff]
    %s1340 = scalar_lea.vmem %s10, 128
    %v1341 = vld [vmem:[%s1340] sm:$0xff]
    %v1342 = vld [vmem:[%s1340 + $0x8] sm:$0xff]
    %v1343 = vld [vmem:[%s1340 + $0x10] sm:$0xff]
    %v1344 = vld [vmem:[%s1340 + $0x18] sm:$0xff]
    %v1345 = vld [vmem:[%s1340 + $0x20] sm:$0xff]
    %v1346 = vld [vmem:[%s1340 + $0x28] sm:$0xff]
    %v1347 = vld [vmem:[%s1340 + $0x30] sm:$0xff]
    %v1348 = vld [vmem:[%s1340 + $0x38] sm:$0xff]
    %v1349 = vld [vmem:[%s1340 + $0x40] sm:$0xff]
    %v1350 = vld [vmem:[%s1340 + $0x48] sm:$0xff]
    %v1351 = vld [vmem:[%s1340 + $0x50] sm:$0xff]
    %v1352 = vld [vmem:[%s1340 + $0x58] sm:$0xff]
    %v1353 = vld [vmem:[%s1340 + $0x60] sm:$0xff]
    %v1354 = vld [vmem:[%s1340 + $0x68] sm:$0xff]
    %v1355 = vld [vmem:[%s1340 + $0x70] sm:$0xff]
    %v1356 = vld [vmem:[%s1340 + $0x78] sm:$0xff]
    %1358 = vset.pattern.permute.xlu0 0
    %1359 = vperm.xlu0 %1358, %v1341
    %v1360 = vpop.permute.xlu0 %1359
    %1363 = vset.pattern.permute.xlu0 0
    %1364 = vperm.xlu0 %1363, %v1342
    %v1365 = vpop.permute.xlu0 %1364
    %1368 = vset.pattern.permute.xlu0 0
    %1369 = vperm.xlu0 %1368, %v1343
    %v1370 = vpop.permute.xlu0 %1369
    %1373 = vset.pattern.permute.xlu0 0
    %1374 = vperm.xlu0 %1373, %v1344
    %v1375 = vpop.permute.xlu0 %1374
    %1378 = vset.pattern.permute.xlu0 0
    %1379 = vperm.xlu0 %1378, %v1345
    %v1380 = vpop.permute.xlu0 %1379
    %1383 = vset.pattern.permute.xlu0 0
    %1384 = vperm.xlu0 %1383, %v1346
    %v1385 = vpop.permute.xlu0 %1384
    %1388 = vset.pattern.permute.xlu0 0
    %1389 = vperm.xlu0 %1388, %v1347
    %v1390 = vpop.permute.xlu0 %1389
    %1393 = vset.pattern.permute.xlu0 0
    %1394 = vperm.xlu0 %1393, %v1348
    %v1395 = vpop.permute.xlu0 %1394
    %1398 = vset.pattern.permute.xlu0 0
    %1399 = vperm.xlu0 %1398, %v1349
    %v1400 = vpop.permute.xlu0 %1399
    %1403 = vset.pattern.permute.xlu0 0
    %1404 = vperm.xlu0 %1403, %v1350
    %v1405 = vpop.permute.xlu0 %1404
    %1408 = vset.pattern.permute.xlu0 0
    %1409 = vperm.xlu0 %1408, %v1351
    %v1410 = vpop.permute.xlu0 %1409
    %1413 = vset.pattern.permute.xlu0 0
    %1414 = vperm.xlu0 %1413, %v1352
    %v1415 = vpop.permute.xlu0 %1414
    %1418 = vset.pattern.permute.xlu0 0
    %1419 = vperm.xlu0 %1418, %v1353
    %v1420 = vpop.permute.xlu0 %1419
    %1423 = vset.pattern.permute.xlu0 0
    %1424 = vperm.xlu0 %1423, %v1354
    %v1425 = vpop.permute.xlu0 %1424
    %1428 = vset.pattern.permute.xlu0 0
    %1429 = vperm.xlu0 %1428, %v1355
    %v1430 = vpop.permute.xlu0 %1429
    %1433 = vset.pattern.permute.xlu0 0
    %1434 = vperm.xlu0 %1433, %v1356
    %v1435 = vpop.permute.xlu0 %1434
    %v1438 = vsel %vm307, %v1324, 0
    %v1441 = vsel %vm307, %v1325, 0
    %v1444 = vsel %vm307, %v1326, 0
    %v1447 = vsel %vm307, %v1327, 0
    %v1450 = vsel %vm307, %v1328, 0
    %v1453 = vsel %vm307, %v1329, 0
    %v1456 = vsel %vm307, %v1330, 0
    %v1459 = vsel %vm307, %v1331, 0
    %v1462 = vsel %vm307, %v1332, 0
    %v1465 = vsel %vm307, %v1333, 0
    %v1468 = vsel %vm307, %v1334, 0
    %v1471 = vsel %vm307, %v1335, 0
    %v1474 = vsel %vm307, %v1336, 0
    %v1477 = vsel %vm307, %v1337, 0
    %v1480 = vsel %vm307, %v1338, 0
    %v1483 = vsel %vm307, %v1339, 0
    %1485 = vmatprep.subr.mxu0 0.0
    %1486 = vmatpush1.msra.mxu0 %v1319
    %1487 = vmatprep.subr.mxu0 0.0
    %1488 = vmatpush1.msra.mxu0 %v1320
    %1489 = vmatprep.subr.mxu0 0.0
    %1490 = vmatpush1.msra.mxu0 %v1321
    %1491 = vmatprep.subr.mxu0 0.0
    %1492 = vmatpush1.msra.mxu0 %v1322
    %1493 = vmatprep.subr.mxu0 0.0
    %1494 = vmatpush1.msra.mxu0 0.0
    %1495 = vmatprep.subr.mxu0 0.0
    %1496 = vmatpush1.msra.mxu0 0.0
    %1497 = vmatprep.subr.mxu0 0.0
    %1498 = vmatpush1.msra.mxu0 0.0
    %1499 = vmatprep.subr.mxu0 0.0
    %1500 = vmatpush1.msra.mxu0 0.0
    %1501 = vmatprep.subr.mxu0 0.0
    %1502 = vmatpush1.msra.mxu0 0.0
    %1503 = vmatprep.subr.mxu0 0.0
    %1504 = vmatpush1.msra.mxu0 0.0
    %1505 = vmatprep.subr.mxu0 0.0
    %1506 = vmatpush1.msra.mxu0 0.0
    %1507 = vmatprep.subr.mxu0 0.0
    %1508 = vmatpush1.msra.mxu0 0.0
    %1509 = vmatprep.subr.mxu0 0.0
    %1510 = vmatpush1.msra.mxu0 0.0
    %1511 = vmatprep.subr.mxu0 0.0
    %1512 = vmatpush1.msra.mxu0 0.0
    %1513 = vmatprep.subr.mxu0 0.0
    %1514 = vmatpush1.msra.mxu0 0.0
    %1515 = vmatprep.subr.mxu0 0.0
    %1516 = vmatpush1.msra.mxu0 0.0
    %1517 = vmatprep.subr.mxu0 0.0
    %1518 = vmatpush1.msra.mxu0 0.0
    %1519 = vmatprep.subr.mxu0 0.0
    %1520 = vmatpush1.msra.mxu0 0.0
    %1521 = vmatprep.subr.mxu0 0.0
    %1522 = vmatpush1.msra.mxu0 0.0
    %1523 = vmatprep.subr.mxu0 0.0
    %1524 = vmatpush1.msra.mxu0 0.0
    %1525 = vmatprep.subr.mxu0 0.0
    %1526 = vmatpush1.msra.mxu0 0.0
    %1527 = vmatprep.subr.mxu0 0.0
    %1528 = vmatpush1.msra.mxu0 0.0
    %1529 = vmatprep.subr.mxu0 0.0
    %1530 = vmatpush1.msra.mxu0 0.0
    %1531 = vmatprep.subr.mxu0 0.0
    %1532 = vmatpush1.msra.mxu0 0.0
    %1533 = vmatprep.subr.mxu0 0.0
    %1534 = vmatpush1.msra.mxu0 0.0
    %1535 = vmatprep.subr.mxu0 0.0
    %1536 = vmatpush1.msra.mxu0 0.0
    %1537 = vmatprep.subr.mxu0 0.0
    %1538 = vmatpush1.msra.mxu0 0.0
    %1539 = vmatprep.subr.mxu0 0.0
    %1540 = vmatpush1.msra.mxu0 0.0
    %1541 = vmatprep.subr.mxu0 0.0
    %1542 = vmatpush1.msra.mxu0 0.0
    %1543 = vmatprep.subr.mxu0 0.0
    %1544 = vmatpush1.msra.mxu0 0.0
    %1545 = vmatprep.subr.mxu0 0.0
    %1546 = vmatpush1.msra.mxu0 0.0
    %1547 = vmatprep.subr.mxu0 0.0
    %1548 = vmatpush1.msra.mxu0 0.0
    %1549 = vmatprep.mubr.f32.mxu0 0.0
    %1550 = vmatmul.mubr.f32.gmra.mrb[0].mxu0 %v1438
    %v1551 = vpop.f32.mrb[0].mxu0
    %v1552 = vadd.f32 %v1360, %v1551
    %v1553 = vpop.f32.mrb[0].mxu0
    %1554 = vmatprep.mubr.f32.mxu0 0.0
    %1555 = vmatmul.mubr.f32.gmra.mrb[0].mxu0 %v1441
    %v1556 = vpop.f32.mrb[0].mxu0
    %v1557 = vadd.f32 %v1365, %v1556
    %v1558 = vpop.f32.mrb[0].mxu0
    %1559 = vmatprep.mubr.f32.mxu0 0.0
    %1560 = vmatmul.mubr.f32.gmra.mrb[0].mxu0 %v1444
    %v1561 = vpop.f32.mrb[0].mxu0
    %v1562 = vadd.f32 %v1370, %v1561
    %v1563 = vpop.f32.mrb[0].mxu0
    %1564 = vmatprep.mubr.f32.mxu0 0.0
    %1565 = vmatmul.mubr.f32.gmra.mrb[0].mxu0 %v1447
    %v1566 = vpop.f32.mrb[0].mxu0
    %v1567 = vadd.f32 %v1375, %v1566
    %v1568 = vpop.f32.mrb[0].mxu0
    %1569 = vmatprep.mubr.f32.mxu0 0.0
    %1570 = vmatmul.mubr.f32.gmra.mrb[0].mxu0 %v1450
    %v1571 = vpop.f32.mrb[0].mxu0
    %v1572 = vadd.f32 %v1380, %v1571
    %v1573 = vpop.f32.mrb[0].mxu0
    %1574 = vmatprep.mubr.f32.mxu0 0.0
    %1575 = vmatmul.mubr.f32.gmra.mrb[0].mxu0 %v1453
    %v1576 = vpop.f32.mrb[0].mxu0
    %v1577 = vadd.f32 %v1385, %v1576
    %v1578 = vpop.f32.mrb[0].mxu0
    %1579 = vmatprep.mubr.f32.mxu0 0.0
    %1580 = vmatmul.mubr.f32.gmra.mrb[0].mxu0 %v1456
    %v1581 = vpop.f32.mrb[0].mxu0
    %v1582 = vadd.f32 %v1390, %v1581
    %v1583 = vpop.f32.mrb[0].mxu0
    %1584 = vmatprep.mubr.f32.mxu0 0.0
    %1585 = vmatmul.mubr.f32.gmra.mrb[0].mxu0 %v1459
    %v1586 = vpop.f32.mrb[0].mxu0
    %v1587 = vadd.f32 %v1395, %v1586
    %v1588 = vpop.f32.mrb[0].mxu0
    %1589 = vmatprep.mubr.f32.mxu0 0.0
    %1590 = vmatmul.mubr.f32.gmra.mrb[0].mxu0 %v1462
    %v1591 = vpop.f32.mrb[0].mxu0
    %v1592 = vadd.f32 %v1400, %v1591
    %v1593 = vpop.f32.mrb[0].mxu0
    %1594 = vmatprep.mubr.f32.mxu0 0.0
    %1595 = vmatmul.mubr.f32.gmra.mrb[0].mxu0 %v1465
    %v1596 = vpop.f32.mrb[0].mxu0
    %v1597 = vadd.f32 %v1405, %v1596
    %v1598 = vpop.f32.mrb[0].mxu0
    %1599 = vmatprep.mubr.f32.mxu0 0.0
    %1600 = vmatmul.mubr.f32.gmra.mrb[0].mxu0 %v1468
    %v1601 = vpop.f32.mrb[0].mxu0
    %v1602 = vadd.f32 %v1410, %v1601
    %v1603 = vpop.f32.mrb[0].mxu0
    %1604 = vmatprep.mubr.f32.mxu0 0.0
    %1605 = vmatmul.mubr.f32.gmra.mrb[0].mxu0 %v1471
    %v1606 = vpop.f32.mrb[0].mxu0
    %v1607 = vadd.f32 %v1415, %v1606
    %v1608 = vpop.f32.mrb[0].mxu0
    %1609 = vmatprep.mubr.f32.mxu0 0.0
    %1610 = vmatmul.mubr.f32.gmra.mrb[0].mxu0 %v1474
    %v1611 = vpop.f32.mrb[0].mxu0
    %v1612 = vadd.f32 %v1420, %v1611
    %v1613 = vpop.f32.mrb[0].mxu0
    %1614 = vmatprep.mubr.f32.mxu0 0.0
    %1615 = vmatmul.mubr.f32.gmra.mrb[0].mxu0 %v1477
    %v1616 = vpop.f32.mrb[0].mxu0
    %v1617 = vadd.f32 %v1425, %v1616
    %v1618 = vpop.f32.mrb[0].mxu0
    %1619 = vmatprep.mubr.f32.mxu0 0.0
    %1620 = vmatmul.mubr.f32.gmra.mrb[0].mxu0 %v1480
    %v1621 = vpop.f32.mrb[0].mxu0
    %v1622 = vadd.f32 %v1430, %v1621
    %v1623 = vpop.f32.mrb[0].mxu0
    %1624 = vmatprep.mubr.f32.mxu0 0.0
    %1625 = vmatmul.mubr.f32.gmra.mrb[0].mxu0 %v1483
    %v1626 = vpop.f32.mrb[0].mxu0
    %v1627 = vadd.f32 %v1435, %v1626
    %v1628 = vpop.f32.mrb[0].mxu0
    %1629 = vdwg.mxu0
    %v1630 = vmul.f32 %v1552, 0.5
    %v1631 = vmul.f32 %v1557, 0.5
    %v1632 = vmul.f32 %v1562, 0.5
    %v1633 = vmul.f32 %v1567, 0.5
    %v1634 = vmul.f32 %v1572, 0.5
    %v1635 = vmul.f32 %v1577, 0.5
    %v1636 = vmul.f32 %v1582, 0.5
    %v1637 = vmul.f32 %v1587, 0.5
    %v1638 = vmul.f32 %v1592, 0.5
    %v1639 = vmul.f32 %v1597, 0.5
    %v1640 = vmul.f32 %v1602, 0.5
    %v1641 = vmul.f32 %v1607, 0.5
    %v1642 = vmul.f32 %v1612, 0.5
    %v1643 = vmul.f32 %v1617, 0.5
    %v1644 = vmul.f32 %v1622, 0.5
    %v1645 = vmul.f32 %v1627, 0.5
    %v1646 = vmul.f32 %v1552, 0.70710677
    %v1647 = vmul.f32 %v1557, 0.70710677
    %v1648 = vmul.f32 %v1562, 0.70710677
    %v1649 = vmul.f32 %v1567, 0.70710677
    %v1650 = vmul.f32 %v1572, 0.70710677
    %v1651 = vmul.f32 %v1577, 0.70710677
    %v1652 = vmul.f32 %v1582, 0.70710677
    %v1653 = vmul.f32 %v1587, 0.70710677
    %v1654 = vmul.f32 %v1592, 0.70710677
    %v1655 = vmul.f32 %v1597, 0.70710677
    %v1656 = vmul.f32 %v1602, 0.70710677
    %v1657 = vmul.f32 %v1607, 0.70710677
    %v1658 = vmul.f32 %v1612, 0.70710677
    %v1659 = vmul.f32 %v1617, 0.70710677
    %v1660 = vmul.f32 %v1622, 0.70710677
    %v1661 = vmul.f32 %v1627, 0.70710677
    %v1662 = verf.f32.pop %v1646
    %v1663 = verf.f32.pop %v1647
    %v1664 = verf.f32.pop %v1648
    %v1665 = verf.f32.pop %v1649
    %v1666 = verf.f32.pop %v1650
    %v1667 = verf.f32.pop %v1651
    %v1668 = verf.f32.pop %v1652
    %v1669 = verf.f32.pop %v1653
    %v1670 = verf.f32.pop %v1654
    %v1671 = verf.f32.pop %v1655
    %v1672 = verf.f32.pop %v1656
    %v1673 = verf.f32.pop %v1657
    %v1674 = verf.f32.pop %v1658
    %v1675 = verf.f32.pop %v1659
    %v1676 = verf.f32.pop %v1660
    %v1677 = verf.f32.pop %v1661
    %v1678 = vadd.f32 %v1662, 1.0
    %v1679 = vadd.f32 %v1663, 1.0
    %v1680 = vadd.f32 %v1664, 1.0
    %v1681 = vadd.f32 %v1665, 1.0
    %v1682 = vadd.f32 %v1666, 1.0
    %v1683 = vadd.f32 %v1667, 1.0
    %v1684 = vadd.f32 %v1668, 1.0
    %v1685 = vadd.f32 %v1669, 1.0
    %v1686 = vadd.f32 %v1670, 1.0
    %v1687 = vadd.f32 %v1671, 1.0
    %v1688 = vadd.f32 %v1672, 1.0
    %v1689 = vadd.f32 %v1673, 1.0
    %v1690 = vadd.f32 %v1674, 1.0
    %v1691 = vadd.f32 %v1675, 1.0
    %v1692 = vadd.f32 %v1676, 1.0
    %v1693 = vadd.f32 %v1677, 1.0
    %v1694 = vmul.f32 %v1630, %v1678
    %v1695 = vmul.f32 %v1631, %v1679
    %v1696 = vmul.f32 %v1632, %v1680
    %v1697 = vmul.f32 %v1633, %v1681
    %v1698 = vmul.f32 %v1634, %v1682
    %v1699 = vmul.f32 %v1635, %v1683
    %v1700 = vmul.f32 %v1636, %v1684
    %v1701 = vmul.f32 %v1637, %v1685
    %v1702 = vmul.f32 %v1638, %v1686
    %v1703 = vmul.f32 %v1639, %v1687
    %v1704 = vmul.f32 %v1640, %v1688
    %v1705 = vmul.f32 %v1641, %v1689
    %v1706 = vmul.f32 %v1642, %v1690
    %v1707 = vmul.f32 %v1643, %v1691
    %v1708 = vmul.f32 %v1644, %v1692
    %v1709 = vmul.f32 %v1645, %v1693
    %s1710 = scalar_lea.vmem %s11, 32
    %v1711 = vld [vmem:[%s1710] sm:$0xff]
    %v1712 = vld [vmem:[%s1710 + $0x8] sm:$0xff]
    %v1713 = vld [vmem:[%s1710 + $0x10] sm:$0xff]
    %v1714 = vld [vmem:[%s1710 + $0x18] sm:$0xff]
    %s1715 = scalar_lea.vmem %s12, 32
    %v1716 = vld [vmem:[%s1715] sm:$0xff]
    %v1717 = vld [vmem:[%s1715 + $0x8] sm:$0xff]
    %v1718 = vld [vmem:[%s1715 + $0x10] sm:$0xff]
    %v1719 = vld [vmem:[%s1715 + $0x18] sm:$0xff]
    %1721 = vset.pattern.permute.xlu0 0
    %1722 = vperm.xlu0 %1721, %v1716
    %v1723 = vpop.permute.xlu0 %1722
    %1726 = vset.pattern.permute.xlu0 0
    %1727 = vperm.xlu0 %1726, %v1717
    %v1728 = vpop.permute.xlu0 %1727
    %1731 = vset.pattern.permute.xlu0 0
    %1732 = vperm.xlu0 %1731, %v1718
    %v1733 = vpop.permute.xlu0 %1732
    %1736 = vset.pattern.permute.xlu0 0
    %1737 = vperm.xlu0 %1736, %v1719
    %v1738 = vpop.permute.xlu0 %1737
    %1740 = vmatprep.subr.mxu0 0.0
    %1741 = vmatpush1.msra.mxu0 %v1694
    %1742 = vmatprep.subr.mxu0 0.0
    %1743 = vmatpush1.msra.mxu0 %v1695
    %1744 = vmatprep.subr.mxu0 0.0
    %1745 = vmatpush1.msra.mxu0 %v1696
    %1746 = vmatprep.subr.mxu0 0.0
    %1747 = vmatpush1.msra.mxu0 %v1697
    %1748 = vmatprep.subr.mxu0 0.0
    %1749 = vmatpush1.msra.mxu0 %v1698
    %1750 = vmatprep.subr.mxu0 0.0
    %1751 = vmatpush1.msra.mxu0 %v1699
    %1752 = vmatprep.subr.mxu0 0.0
    %1753 = vmatpush1.msra.mxu0 %v1700
    %1754 = vmatprep.subr.mxu0 0.0
    %1755 = vmatpush1.msra.mxu0 %v1701
    %1756 = vmatprep.subr.mxu0 0.0
    %1757 = vmatpush1.msra.mxu0 %v1702
    %1758 = vmatprep.subr.mxu0 0.0
    %1759 = vmatpush1.msra.mxu0 %v1703
    %1760 = vmatprep.subr.mxu0 0.0
    %1761 = vmatpush1.msra.mxu0 %v1704
    %1762 = vmatprep.subr.mxu0 0.0
    %1763 = vmatpush1.msra.mxu0 %v1705
    %1764 = vmatprep.subr.mxu0 0.0
    %1765 = vmatpush1.msra.mxu0 %v1706
    %1766 = vmatprep.subr.mxu0 0.0
    %1767 = vmatpush1.msra.mxu0 %v1707
    %1768 = vmatprep.subr.mxu0 0.0
    %1769 = vmatpush1.msra.mxu0 %v1708
    %1770 = vmatprep.subr.mxu0 0.0
    %1771 = vmatpush1.msra.mxu0 %v1709
    %1772 = vmatprep.subr.mxu0 0.0
    %1773 = vmatpush1.msra.mxu0 0.0
    %1774 = vmatprep.subr.mxu0 0.0
    %1775 = vmatpush1.msra.mxu0 0.0
    %1776 = vmatprep.subr.mxu0 0.0
    %1777 = vmatpush1.msra.mxu0 0.0
    %1778 = vmatprep.subr.mxu0 0.0
    %1779 = vmatpush1.msra.mxu0 0.0
    %1780 = vmatprep.subr.mxu0 0.0
    %1781 = vmatpush1.msra.mxu0 0.0
    %1782 = vmatprep.subr.mxu0 0.0
    %1783 = vmatpush1.msra.mxu0 0.0
    %1784 = vmatprep.subr.mxu0 0.0
    %1785 = vmatpush1.msra.mxu0 0.0
    %1786 = vmatprep.subr.mxu0 0.0
    %1787 = vmatpush1.msra.mxu0 0.0
    %1788 = vmatprep.subr.mxu0 0.0
    %1789 = vmatpush1.msra.mxu0 0.0
    %1790 = vmatprep.subr.mxu0 0.0
    %1791 = vmatpush1.msra.mxu0 0.0
    %1792 = vmatprep.subr.mxu0 0.0
    %1793 = vmatpush1.msra.mxu0 0.0
    %1794 = vmatprep.subr.mxu0 0.0
    %1795 = vmatpush1.msra.mxu0 0.0
    %1796 = vmatprep.subr.mxu0 0.0
    %1797 = vmatpush1.msra.mxu0 0.0
    %1798 = vmatprep.subr.mxu0 0.0
    %1799 = vmatpush1.msra.mxu0 0.0
    %1800 = vmatprep.subr.mxu0 0.0
    %1801 = vmatpush1.msra.mxu0 0.0
    %1802 = vmatprep.subr.mxu0 0.0
    %1803 = vmatpush1.msra.mxu0 0.0
    %1804 = vmatprep.mubr.f32.mxu0 0.0
    %1805 = vmatmul.mubr.f32.gmra.mrb[0].mxu0 %v1711
    %v1806 = vpop.f32.mrb[0].mxu0
    %v1807 = vadd.f32 %v1723, %v1806
    %v1808 = vpop.f32.mrb[0].mxu0
    %1809 = vmatprep.mubr.f32.mxu0 0.0
    %1810 = vmatmul.mubr.f32.gmra.mrb[0].mxu0 %v1712
    %v1811 = vpop.f32.mrb[0].mxu0
    %v1812 = vadd.f32 %v1728, %v1811
    %v1813 = vpop.f32.mrb[0].mxu0
    %1814 = vmatprep.mubr.f32.mxu0 0.0
    %1815 = vmatmul.mubr.f32.gmra.mrb[0].mxu0 %v1713
    %v1816 = vpop.f32.mrb[0].mxu0
    %v1817 = vadd.f32 %v1733, %v1816
    %v1818 = vpop.f32.mrb[0].mxu0
    %1819 = vmatprep.mubr.f32.mxu0 0.0
    %1820 = vmatmul.mubr.f32.gmra.mrb[0].mxu0 %v1714
    %v1821 = vpop.f32.mrb[0].mxu0
    %v1822 = vadd.f32 %v1738, %v1821
    %v1823 = vpop.f32.mrb[0].mxu0
    %1824 = vdwg.mxu0
    %v1825 = vadd.f32 %v1807, %v1319
    %v1826 = vadd.f32 %v1812, %v1320
    %v1827 = vadd.f32 %v1817, %v1321
    %v1828 = vadd.f32 %v1822, %v1322
    %s1829 = scalar_lea.vmem %s13, 32
    %v1830 = vld [vmem:[%s1829] sm:$0xff]
    %v1831 = vld [vmem:[%s1829 + $0x8] sm:$0xff]
    %v1832 = vld [vmem:[%s1829 + $0x10] sm:$0xff]
    %v1833 = vld [vmem:[%s1829 + $0x18] sm:$0xff]
    %s1834 = scalar_lea.vmem %s14, 32
    %v1835 = vld [vmem:[%s1834] sm:$0xff]
    %v1836 = vld [vmem:[%s1834 + $0x8] sm:$0xff]
    %v1837 = vld [vmem:[%s1834 + $0x10] sm:$0xff]
    %v1838 = vld [vmem:[%s1834 + $0x18] sm:$0xff]
    %v1839 = vadd.f32 %v1825, %v1826
    %v1840 = vadd.f32 %v1839, %v1827
    %v1841 = vadd.f32 %v1840, %v1828
    %v1842 = vrot.slane %v1841, 4
    %v1843 = vadd.f32 %v1841, %v1842
    %v1844 = vrot.slane %v1843, 2
    %v1845 = vadd.f32 %v1843, %v1844
    %v1846 = vrot.slane %v1845, 1
    %v1847 = vadd.f32 %v1845, %v1846
    %v1848 = vmul.f32 %v1847, %v202
    %v1849 = vmul.f32 %v1825, %v1825
    %v1850 = vmul.f32 %v1826, %v1826
    %v1851 = vmul.f32 %v1827, %v1827
    %v1852 = vmul.f32 %v1828, %v1828
    %v1853 = vadd.f32 %v1849, %v1850
    %v1854 = vadd.f32 %v1853, %v1851
    %v1855 = vadd.f32 %v1854, %v1852
    %v1856 = vrot.slane %v1855, 4
    %v1857 = vadd.f32 %v1855, %v1856
    %v1858 = vrot.slane %v1857, 2
    %v1859 = vadd.f32 %v1857, %v1858
    %v1860 = vrot.slane %v1859, 1
    %v1861 = vadd.f32 %v1859, %v1860
    %v1862 = vmul.f32 %v1861, %v202
    %v1863 = vmul.f32 %v1848, %v1848
    %v1864 = vsub.f32 %v1862, %v1863
    %v1865 = vmax.f32 %v1864, 0.0
    %v1866 = vsub.f32 %v1825, %v1848
    %v1867 = vsub.f32 %v1826, %v1848
    %v1868 = vsub.f32 %v1827, %v1848
    %v1869 = vsub.f32 %v1828, %v1848
    %v1870 = vadd.f32 %v1865, 1e-12
    %v1871 = vrsqrt.pop %v1870
    %v1872 = vmul.f32 %v1866, %v1871
    %v1873 = vmul.f32 %v1867, %v1871
    %v1874 = vmul.f32 %v1868, %v1871
    %v1875 = vmul.f32 %v1869, %v1871
    %1877 = vset.pattern.permute.xlu0 0
    %1878 = vperm.xlu0 %1877, %v1830
    %v1879 = vpop.permute.xlu0 %1878
    %1882 = vset.pattern.permute.xlu0 0
    %1883 = vperm.xlu0 %1882, %v1831
    %v1884 = vpop.permute.xlu0 %1883
    %1887 = vset.pattern.permute.xlu0 0
    %1888 = vperm.xlu0 %1887, %v1832
    %v1889 = vpop.permute.xlu0 %1888
    %1892 = vset.pattern.permute.xlu0 0
    %1893 = vperm.xlu0 %1892, %v1833
    %v1894 = vpop.permute.xlu0 %1893
    %v1896 = vmul.f32 %v1872, %v1879
    %v1897 = vmul.f32 %v1873, %v1884
    %v1898 = vmul.f32 %v1874, %v1889
    %v1899 = vmul.f32 %v1875, %v1894
    %1901 = vset.pattern.permute.xlu0 0
    %1902 = vperm.xlu0 %1901, %v1835
    %v1903 = vpop.permute.xlu0 %1902
    %1906 = vset.pattern.permute.xlu0 0
    %1907 = vperm.xlu0 %1906, %v1836
    %v1908 = vpop.permute.xlu0 %1907
    %1911 = vset.pattern.permute.xlu0 0
    %1912 = vperm.xlu0 %1911, %v1837
    %v1913 = vpop.permute.xlu0 %1912
    %1916 = vset.pattern.permute.xlu0 0
    %1917 = vperm.xlu0 %1916, %v1838
    %v1918 = vpop.permute.xlu0 %1917
    %v1920 = vadd.f32 %v1896, %v1903
    %v1921 = vadd.f32 %v1897, %v1908
    %v1922 = vadd.f32 %v1898, %v1913
    %v1923 = vadd.f32 %v1899, %v1918
    %v1924 = vld [vmem:[%s15] sm:$0xff]
    %v1925 = vld [vmem:[%s16] sm:$0xff]
    %1927 = vset.pattern.permute.xlu0 0
    %1928 = vperm.xlu0 %1927, %v1925
    %v1929 = vpop.permute.xlu0 %1928
    %v1932 = vsel %vm307, %v1924, 0
    %1934 = vmatprep.subr.mxu0 0.0
    %1935 = vmatpush1.msra.mxu0 %v1920
    %1936 = vmatprep.subr.mxu0 0.0
    %1937 = vmatpush1.msra.mxu0 %v1921
    %1938 = vmatprep.subr.mxu0 0.0
    %1939 = vmatpush1.msra.mxu0 %v1922
    %1940 = vmatprep.subr.mxu0 0.0
    %1941 = vmatpush1.msra.mxu0 %v1923
    %1942 = vmatprep.subr.mxu0 0.0
    %1943 = vmatpush1.msra.mxu0 0.0
    %1944 = vmatprep.subr.mxu0 0.0
    %1945 = vmatpush1.msra.mxu0 0.0
    %1946 = vmatprep.subr.mxu0 0.0
    %1947 = vmatpush1.msra.mxu0 0.0
    %1948 = vmatprep.subr.mxu0 0.0
    %1949 = vmatpush1.msra.mxu0 0.0
    %1950 = vmatprep.subr.mxu0 0.0
    %1951 = vmatpush1.msra.mxu0 0.0
    %1952 = vmatprep.subr.mxu0 0.0
    %1953 = vmatpush1.msra.mxu0 0.0
    %1954 = vmatprep.subr.mxu0 0.0
    %1955 = vmatpush1.msra.mxu0 0.0
    %1956 = vmatprep.subr.mxu0 0.0
    %1957 = vmatpush1.msra.mxu0 0.0
    %1958 = vmatprep.subr.mxu0 0.0
    %1959 = vmatpush1.msra.mxu0 0.0
    %1960 = vmatprep.subr.mxu0 0.0
    %1961 = vmatpush1.msra.mxu0 0.0
    %1962 = vmatprep.subr.mxu0 0.0
    %1963 = vmatpush1.msra.mxu0 0.0
    %1964 = vmatprep.subr.mxu0 0.0
    %1965 = vmatpush1.msra.mxu0 0.0
    %1966 = vmatprep.subr.mxu0 0.0
    %1967 = vmatpush1.msra.mxu0 0.0
    %1968 = vmatprep.subr.mxu0 0.0
    %1969 = vmatpush1.msra.mxu0 0.0
    %1970 = vmatprep.subr.mxu0 0.0
    %1971 = vmatpush1.msra.mxu0 0.0
    %1972 = vmatprep.subr.mxu0 0.0
    %1973 = vmatpush1.msra.mxu0 0.0
    %1974 = vmatprep.subr.mxu0 0.0
    %1975 = vmatpush1.msra.mxu0 0.0
    %1976 = vmatprep.subr.mxu0 0.0
    %1977 = vmatpush1.msra.mxu0 0.0
    %1978 = vmatprep.subr.mxu0 0.0
    %1979 = vmatpush1.msra.mxu0 0.0
    %1980 = vmatprep.subr.mxu0 0.0
    %1981 = vmatpush1.msra.mxu0 0.0
    %1982 = vmatprep.subr.mxu0 0.0
    %1983 = vmatpush1.msra.mxu0 0.0
    %1984 = vmatprep.subr.mxu0 0.0
    %1985 = vmatpush1.msra.mxu0 0.0
    %1986 = vmatprep.subr.mxu0 0.0
    %1987 = vmatpush1.msra.mxu0 0.0
    %1988 = vmatprep.subr.mxu0 0.0
    %1989 = vmatpush1.msra.mxu0 0.0
    %1990 = vmatprep.subr.mxu0 0.0
    %1991 = vmatpush1.msra.mxu0 0.0
    %1992 = vmatprep.subr.mxu0 0.0
    %1993 = vmatpush1.msra.mxu0 0.0
    %1994 = vmatprep.subr.mxu0 0.0
    %1995 = vmatpush1.msra.mxu0 0.0
    %1996 = vmatprep.subr.mxu0 0.0
    %1997 = vmatpush1.msra.mxu0 0.0
    %1998 = vmatprep.mubr.f32.mxu0 0.0
    %1999 = vmatmul.mubr.f32.gmra.mrb[0].mxu0 %v1932
    %v2000 = vpop.f32.mrb[0].mxu0
    %v2001 = vadd.f32 %v1929, %v2000
    %v2002 = vpop.f32.mrb[0].mxu0
    %2003 = vdwg.mxu0
    %2004 = vst [vmem:[#allocation2] sm:$0xff] %v2001
    // Predicated region
    $region70: #{tpu_custom_call.1} parent=1 // pred_check
      _
    $region71: #{tpu_custom_call.1} parent=1 // pred_check_branch
      %2006 = sbr.rel (0) target = $region73
    $region72: #{tpu_custom_call.1} parent=1 // pred_region
      %s2008 = ssub.s32 128, 128
      %2009 = vsyncadd [#allocation3], %s2008
      %s2011 = sshll.u32 [#allocation2], 4
      %s2012 = int_to_ptr.vmem [resolvable:$true] %s2011
      %2014 = dma.vmem_to_hbm [thread:$0]  %s2012, 128, %s17, [#allocation3]
    $region73: #{tpu_custom_call.1} parent=1 // pred_fallthru
      _
    // Predicated region
    $region74: #{tpu_custom_call.1} parent=1 // pred_check
      _
    $region75: #{tpu_custom_call.1} parent=1 // pred_check_branch
      %2016 = sbr.rel (0) target = $region77
    $region76: #{tpu_custom_call.1} parent=1 // pred_region
      %2017 = dma.done [#allocation3], 128
    $region77: #{tpu_custom_call.1} parent=1 // pred_fallthru
      _
    %2018 = vsyncpa [#allocation3], 1

</llo_original>
